<compile_context>
chip_gen: v7x
topology: tpu7x:2x2x1
jax: 0.10.0
libtpu: 0.0.40
codegen_flags: <defaults>
</compile_context>

<pallas_src>
import jax
import jax.numpy as jnp
from jax.experimental import pallas as pl
from jax.experimental.pallas import tpu as pltpu  # noqa: F401  (TPU backend assumed)

# Problem sizes implied by the module / its captured input.
C_IN = 384
C_OUT = 384
H = 5
W = 5
KH = 3   # kernel height
KW = 1   # kernel width
HW = H * W           # 25 output columns per channel
K_DIM = KH * C_IN    # 1152 = contraction dim of the im2col matmul

assert KW == 1, "H-only im2col formulation is only valid for kernel width 1"


def conv3x1_kernel(x_ref, w_ref, o_ref):
    """x_ref: [KH*C_IN, HW] bf16, w_ref: [C_OUT, KH*C_IN] bf16, o_ref: [C_OUT, HW] f32.

    Single MXU matmul producing exactly the output tile (f32 accumulation),
    no wasted columns, no post-matmul slicing/rotations.
    """
    o_ref[...] = jnp.dot(w_ref[...], x_ref[...],
                         preferred_element_type=jnp.float32)


def prepare_weight(weight_oihw):
    """One-time weight repack (hoisted out of the per-call path).

    weight_oihw: [C_OUT, C_IN, KH, 1] float32 (PyTorch OIHW layout)
    returns:     [C_OUT, KH*C_IN]     bfloat16, column index = kh*C_IN + ci
    """
    w = weight_oihw[:, :, :, 0]            # [C_OUT, C_IN, KH]
    w = jnp.transpose(w, (0, 2, 1))        # [C_OUT, KH, C_IN]
    return w.reshape(C_OUT, K_DIM).astype(jnp.bfloat16)


def conv2d_3x1(x_nchw, w_stacked):
    """Equivalent of Conv2d(384, 384, (3,1), stride=1, padding=(1,0), bias=False).

    x_nchw:    [1, C_IN, H, W]    float32
    w_stacked: [C_OUT, KH*C_IN]   bfloat16 (from prepare_weight, built once)
    returns:   [1, C_OUT, H, W]   float32
    """
    # Activation im2col along H only (valid because KW == 1): pad H by 1 on each side,
    # stack the KH shifted windows along the channel axis.  ~60 KiB of activation data,
    # negligible next to the 864 KiB weight DMA.
    x = x_nchw[0]                                              # [C_IN, H, W]
    x_pad = jnp.pad(x, ((0, 0), (1, 1), (0, 0)))               # [C_IN, H+2, W]
    x3 = jnp.concatenate(
        [x_pad[:, kh:kh + H, :].reshape(C_IN, HW) for kh in range(KH)],
        axis=0,
    ).astype(jnp.bfloat16)                                     # [KH*C_IN, HW]

    out_flat = pl.pallas_call(
        conv3x1_kernel,
        out_shape=jax.ShapeDtypeStruct((C_OUT, HW), jnp.float32),
        in_specs=[
            pl.BlockSpec((K_DIM, HW), lambda: (0, 0)),     # whole im2col activation in VMEM
            pl.BlockSpec((C_OUT, K_DIM), lambda: (0, 0)),  # whole stacked weight in VMEM
        ],
        out_specs=pl.BlockSpec((C_OUT, HW), lambda: (0, 0)),
        cost_estimate=pl.CostEstimate(
            flops=2 * C_OUT * K_DIM * HW,                                   # ~22 MFLOP
            bytes_accessed=C_OUT * K_DIM * 2 + K_DIM * HW * 2 + C_OUT * HW * 4,
            transcendentals=0,
        ),
    )(x3, w_stacked)

    # Free reshape back to NCHW (column index c = h*W + w splits directly into (h, w)).
    return out_flat.reshape(1, C_OUT, H, W)


if __name__ == "__main__":
    key = jax.random.PRNGKey(0)
    kx, kw = jax.random.split(key)

    # Deterministic synthetic input and weights (shapes from the module).
    x = jax.random.normal(kx, (1, C_IN, H, W), dtype=jnp.float32)
    weight = jax.random.normal(kw, (C_OUT, C_IN, KH, KW), dtype=jnp.float32) * 0.05

    # One-time weight repack (outside the per-call path, per perf review).
    w_stacked = jax.block_until_ready(prepare_weight(weight))

    f = jax.jit(conv2d_3x1)
    y = jax.block_until_ready(f(x, w_stacked))

    # Reference: plain XLA conv on the same bf16-rounded operands
    # (kernel computes bf16 x bf16 with f32 accumulation).
    xq = x.astype(jnp.bfloat16).astype(jnp.float32)
    wq = weight.astype(jnp.bfloat16).astype(jnp.float32)
    y_ref = jax.lax.conv_general_dilated(
        xq, wq,
        window_strides=(1, 1),
        padding=((1, 1), (0, 0)),
        dimension_numbers=("NCHW", "OIHW", "NCHW"),
    )
    y_ref = jax.block_until_ready(y_ref)

    assert y.shape == (1, C_OUT, H, W), y.shape
    assert jnp.allclose(y, y_ref, atol=1e-2, rtol=1e-2), float(jnp.max(jnp.abs(y - y_ref)))

    print("KERNEL_OK")
</pallas_src>

<mosaic_0001>
module attributes {stable_mosaic.version = 11 : i64} {
  func.func @conv3x1_kernel(%arg0: memref<1152x25xbf16, #tpu.memory_space<vmem>>, %arg1: memref<384x1152xbf16, #tpu.memory_space<vmem>>, %arg2: memref<384x25xf32, #tpu.memory_space<vmem>>) attributes {dimension_semantics = [], scalar_prefetch = 0 : i64, scratch_operands = 0 : i64, tpu.core_type = #tpu.core_type<tc>} {
    %c0 = arith.constant 0 : index
    %c0_0 = arith.constant 0 : index
    %0 = vector.load %arg1[%c0, %c0_0] : memref<384x1152xbf16, #tpu.memory_space<vmem>>, vector<384x1152xbf16>
    %c0_1 = arith.constant 0 : index
    %c0_2 = arith.constant 0 : index
    %1 = vector.load %arg0[%c0_1, %c0_2] : memref<1152x25xbf16, #tpu.memory_space<vmem>>, vector<1152x25xbf16>
    %cst = arith.constant dense<0.000000e+00> : vector<384x25xf32>
    %2 = tpu.matmul %0, %1, %cst {dimension_numbers = #tpu.dot_dimension_numbers<[1], [0], [0], [1], [0, 0, 1, 1], [], []>} : vector<384x1152xbf16>, vector<1152x25xbf16>, vector<384x25xf32> -> vector<384x25xf32>
    %c0_3 = arith.constant 0 : index
    %c0_4 = arith.constant 0 : index
    %3 = vector.load %arg2[%c0_3, %c0_4] : memref<384x25xf32, #tpu.memory_space<vmem>>, vector<384x25xf32>
    tpu.vector_store %arg2[%c0_3, %c0_4], %2 {strides = array<i32>} : memref<384x25xf32, #tpu.memory_space<vmem>>, vector<384x25xf32>,
    return
  }
}

</mosaic_0001>

<llo_original>
// kernel: conv2d_3x1.1
$region0: #{conv2d_3x1.1}
  #allocation0 [shape = 'u32[]', space=smem, size = 0x4, offset = 0x4, fixed_abs, tag = 'smem constant byte address 0x4 - core index']
  #allocation1 [shape = 'u32[144,128]{1,0:T(1,128)}', space=vmem, size = 0x12000, scoped, tag = 'internal scratch']
  %s0 = inlined_call_operand.vmem [shape: bf16[1152,25], index: 0, kind: input, shape index: {}]
  %s1 = inlined_call_operand.vmem [shape: bf16[384,1152], index: 1, kind: input, shape index: {}]
  %s2 = inlined_call_operand.vmem [shape: f32[384,25], index: 2, kind: output, shape index: {}]
  %s3 = sld [smem:[#allocation0]]
  $region18: #{conv2d_3x1.1} parent=0
    _
  %s5 = ssub.s32 1, %s3
  %s6 = scalar_select 0, %s5, %s3
  // Predicated region
  $region2: #{conv2d_3x1.1} parent=0 // pred_check
    _
  $region3: #{conv2d_3x1.1} parent=0 // pred_check_branch
    %8 = sbr.rel (0) target = $region5
  $region4: #{conv2d_3x1.1} parent=0 // pred_region
    _
  $region5: #{conv2d_3x1.1} parent=0 // pred_fallthru
    _
  // Predicated region
  $region6: #{conv2d_3x1.1} parent=0 // pred_check
    _
  $region7: #{conv2d_3x1.1} parent=0 // pred_check_branch
    %10 = sbr.rel (0) target = $region9
  $region8: #{conv2d_3x1.1} parent=0 // pred_region
    _
  $region9: #{conv2d_3x1.1} parent=0 // pred_fallthru
    _
  %v12 = vld [vmem:[%s1] sm:$0xff]
  %v13 = vld [vmem:[%s1 + $0x8] sm:$0xff]
  %v14 = vld [vmem:[%s1 + $0x10] sm:$0xff]
  %v15 = vld [vmem:[%s1 + $0x18] sm:$0xff]
  %v16 = vld [vmem:[%s1 + $0x20] sm:$0xf]
  %v17 = vld [vmem:[%s1 + $0x24] sm:$0xff]
  %v18 = vld [vmem:[%s1 + $0x2c] sm:$0xff]
  %v19 = vld [vmem:[%s1 + $0x34] sm:$0xff]
  %v20 = vld [vmem:[%s1 + $0x3c] sm:$0xff]
  %v21 = vld [vmem:[%s1 + $0x44] sm:$0xf]
  %v22 = vld [vmem:[%s1 + $0x48] sm:$0xff]
  %v23 = vld [vmem:[%s1 + $0x50] sm:$0xff]
  %v24 = vld [vmem:[%s1 + $0x58] sm:$0xff]
  %v25 = vld [vmem:[%s1 + $0x60] sm:$0xff]
  %v26 = vld [vmem:[%s1 + $0x68] sm:$0xf]
  %v27 = vld [vmem:[%s1 + $0x6c] sm:$0xff]
  %v28 = vld [vmem:[%s1 + $0x74] sm:$0xff]
  %v29 = vld [vmem:[%s1 + $0x7c] sm:$0xff]
  %v30 = vld [vmem:[%s1 + $0x84] sm:$0xff]
  %v31 = vld [vmem:[%s1 + $0x8c] sm:$0xf]
  %v32 = vld [vmem:[%s1 + $0x90] sm:$0xff]
  %v33 = vld [vmem:[%s1 + $0x98] sm:$0xff]
  %v34 = vld [vmem:[%s1 + $0xa0] sm:$0xff]
  %v35 = vld [vmem:[%s1 + $0xa8] sm:$0xff]
  %v36 = vld [vmem:[%s1 + $0xb0] sm:$0xf]
  %v37 = vld [vmem:[%s1 + $0xb4] sm:$0xff]
  %v38 = vld [vmem:[%s1 + $0xbc] sm:$0xff]
  %v39 = vld [vmem:[%s1 + $0xc4] sm:$0xff]
  %v40 = vld [vmem:[%s1 + $0xcc] sm:$0xff]
  %v41 = vld [vmem:[%s1 + $0xd4] sm:$0xf]
  %v42 = vld [vmem:[%s1 + $0xd8] sm:$0xff]
  %v43 = vld [vmem:[%s1 + $0xe0] sm:$0xff]
  %v44 = vld [vmem:[%s1 + $0xe8] sm:$0xff]
  %v45 = vld [vmem:[%s1 + $0xf0] sm:$0xff]
  %v46 = vld [vmem:[%s1 + $0xf8] sm:$0xf]
  %v47 = vld [vmem:[%s1 + $0xfc] sm:$0xff]
  %v48 = vld [vmem:[%s1 + $0x104] sm:$0xff]
  %v49 = vld [vmem:[%s1 + $0x10c] sm:$0xff]
  %v50 = vld [vmem:[%s1 + $0x114] sm:$0xff]
  %v51 = vld [vmem:[%s1 + $0x11c] sm:$0xf]
  %v52 = vld [vmem:[%s1 + $0x120] sm:$0xff]
  %v53 = vld [vmem:[%s1 + $0x128] sm:$0xff]
  %v54 = vld [vmem:[%s1 + $0x130] sm:$0xff]
  %v55 = vld [vmem:[%s1 + $0x138] sm:$0xff]
  %v56 = vld [vmem:[%s1 + $0x140] sm:$0xf]
  %v57 = vld [vmem:[%s1 + $0x144] sm:$0xff]
  %v58 = vld [vmem:[%s1 + $0x14c] sm:$0xff]
  %v59 = vld [vmem:[%s1 + $0x154] sm:$0xff]
  %v60 = vld [vmem:[%s1 + $0x15c] sm:$0xff]
  %v61 = vld [vmem:[%s1 + $0x164] sm:$0xf]
  %v62 = vld [vmem:[%s1 + $0x168] sm:$0xff]
  %v63 = vld [vmem:[%s1 + $0x170] sm:$0xff]
  %v64 = vld [vmem:[%s1 + $0x178] sm:$0xff]
  %v65 = vld [vmem:[%s1 + $0x180] sm:$0xff]
  %v66 = vld [vmem:[%s1 + $0x188] sm:$0xf]
  %v67 = vld [vmem:[%s1 + $0x18c] sm:$0xff]
  %v68 = vld [vmem:[%s1 + $0x194] sm:$0xff]
  %v69 = vld [vmem:[%s1 + $0x19c] sm:$0xff]
  %v70 = vld [vmem:[%s1 + $0x1a4] sm:$0xff]
  %v71 = vld [vmem:[%s1 + $0x1ac] sm:$0xf]
  %v72 = vld [vmem:[%s1 + $0x1b0] sm:$0xff]
  %v73 = vld [vmem:[%s1 + $0x1b8] sm:$0xff]
  %v74 = vld [vmem:[%s1 + $0x1c0] sm:$0xff]
  %v75 = vld [vmem:[%s1 + $0x1c8] sm:$0xff]
  %v76 = vld [vmem:[%s1 + $0x1d0] sm:$0xf]
  %v77 = vld [vmem:[%s1 + $0x1d4] sm:$0xff]
  %v78 = vld [vmem:[%s1 + $0x1dc] sm:$0xff]
  %v79 = vld [vmem:[%s1 + $0x1e4] sm:$0xff]
  %v80 = vld [vmem:[%s1 + $0x1ec] sm:$0xff]
  %v81 = vld [vmem:[%s1 + $0x1f4] sm:$0xf]
  %v82 = vld [vmem:[%s1 + $0x1f8] sm:$0xff]
  %v83 = vld [vmem:[%s1 + $0x200] sm:$0xff]
  %v84 = vld [vmem:[%s1 + $0x208] sm:$0xff]
  %v85 = vld [vmem:[%s1 + $0x210] sm:$0xff]
  %v86 = vld [vmem:[%s1 + $0x218] sm:$0xf]
  %v87 = vld [vmem:[%s1 + $0x21c] sm:$0xff]
  %v88 = vld [vmem:[%s1 + $0x224] sm:$0xff]
  %v89 = vld [vmem:[%s1 + $0x22c] sm:$0xff]
  %v90 = vld [vmem:[%s1 + $0x234] sm:$0xff]
  %v91 = vld [vmem:[%s1 + $0x23c] sm:$0xf]
  %v92 = vld [vmem:[%s1 + $0x240] sm:$0xff]
  %v93 = vld [vmem:[%s1 + $0x248] sm:$0xff]
  %v94 = vld [vmem:[%s1 + $0x250] sm:$0xff]
  %v95 = vld [vmem:[%s1 + $0x258] sm:$0xff]
  %v96 = vld [vmem:[%s1 + $0x260] sm:$0xf]
  %v97 = vld [vmem:[%s1 + $0x264] sm:$0xff]
  %v98 = vld [vmem:[%s1 + $0x26c] sm:$0xff]
  %v99 = vld [vmem:[%s1 + $0x274] sm:$0xff]
  %v100 = vld [vmem:[%s1 + $0x27c] sm:$0xff]
  %v101 = vld [vmem:[%s1 + $0x284] sm:$0xf]
  %v102 = vld [vmem:[%s1 + $0x288] sm:$0xff]
  %v103 = vld [vmem:[%s1 + $0x290] sm:$0xff]
  %v104 = vld [vmem:[%s1 + $0x298] sm:$0xff]
  %v105 = vld [vmem:[%s1 + $0x2a0] sm:$0xff]
  %v106 = vld [vmem:[%s1 + $0x2a8] sm:$0xf]
  %v107 = vld [vmem:[%s1 + $0x2ac] sm:$0xff]
  %v108 = vld [vmem:[%s1 + $0x2b4] sm:$0xff]
  %v109 = vld [vmem:[%s1 + $0x2bc] sm:$0xff]
  %v110 = vld [vmem:[%s1 + $0x2c4] sm:$0xff]
  %v111 = vld [vmem:[%s1 + $0x2cc] sm:$0xf]
  %v112 = vld [vmem:[%s1 + $0x2d0] sm:$0xff]
  %v113 = vld [vmem:[%s1 + $0x2d8] sm:$0xff]
  %v114 = vld [vmem:[%s1 + $0x2e0] sm:$0xff]
  %v115 = vld [vmem:[%s1 + $0x2e8] sm:$0xff]
  %v116 = vld [vmem:[%s1 + $0x2f0] sm:$0xf]
  %v117 = vld [vmem:[%s1 + $0x2f4] sm:$0xff]
  %v118 = vld [vmem:[%s1 + $0x2fc] sm:$0xff]
  %v119 = vld [vmem:[%s1 + $0x304] sm:$0xff]
  %v120 = vld [vmem:[%s1 + $0x30c] sm:$0xff]
  %v121 = vld [vmem:[%s1 + $0x314] sm:$0xf]
  %v122 = vld [vmem:[%s1 + $0x318] sm:$0xff]
  %v123 = vld [vmem:[%s1 + $0x320] sm:$0xff]
  %v124 = vld [vmem:[%s1 + $0x328] sm:$0xff]
  %v125 = vld [vmem:[%s1 + $0x330] sm:$0xff]
  %v126 = vld [vmem:[%s1 + $0x338] sm:$0xf]
  %v127 = vld [vmem:[%s1 + $0x33c] sm:$0xff]
  %v128 = vld [vmem:[%s1 + $0x344] sm:$0xff]
  %v129 = vld [vmem:[%s1 + $0x34c] sm:$0xff]
  %v130 = vld [vmem:[%s1 + $0x354] sm:$0xff]
  %v131 = vld [vmem:[%s1 + $0x35c] sm:$0xf]
  %v132 = vld [vmem:[%s1 + $0x360] sm:$0xff]
  %v133 = vld [vmem:[%s1 + $0x368] sm:$0xff]
  %v134 = vld [vmem:[%s1 + $0x370] sm:$0xff]
  %v135 = vld [vmem:[%s1 + $0x378] sm:$0xff]
  %v136 = vld [vmem:[%s1 + $0x380] sm:$0xf]
  %v137 = vld [vmem:[%s1 + $0x384] sm:$0xff]
  %v138 = vld [vmem:[%s1 + $0x38c] sm:$0xff]
  %v139 = vld [vmem:[%s1 + $0x394] sm:$0xff]
  %v140 = vld [vmem:[%s1 + $0x39c] sm:$0xff]
  %v141 = vld [vmem:[%s1 + $0x3a4] sm:$0xf]
  %v142 = vld [vmem:[%s1 + $0x3a8] sm:$0xff]
  %v143 = vld [vmem:[%s1 + $0x3b0] sm:$0xff]
  %v144 = vld [vmem:[%s1 + $0x3b8] sm:$0xff]
  %v145 = vld [vmem:[%s1 + $0x3c0] sm:$0xff]
  %v146 = vld [vmem:[%s1 + $0x3c8] sm:$0xf]
  %v147 = vld [vmem:[%s1 + $0x3cc] sm:$0xff]
  %v148 = vld [vmem:[%s1 + $0x3d4] sm:$0xff]
  %v149 = vld [vmem:[%s1 + $0x3dc] sm:$0xff]
  %v150 = vld [vmem:[%s1 + $0x3e4] sm:$0xff]
  %v151 = vld [vmem:[%s1 + $0x3ec] sm:$0xf]
  %v152 = vld [vmem:[%s1 + $0x3f0] sm:$0xff]
  %v153 = vld [vmem:[%s1 + $0x3f8] sm:$0xff]
  %v154 = vld [vmem:[%s1 + $0x400] sm:$0xff]
  %v155 = vld [vmem:[%s1 + $0x408] sm:$0xff]
  %v156 = vld [vmem:[%s1 + $0x410] sm:$0xf]
  %v157 = vld [vmem:[%s1 + $0x414] sm:$0xff]
  %v158 = vld [vmem:[%s1 + $0x41c] sm:$0xff]
  %v159 = vld [vmem:[%s1 + $0x424] sm:$0xff]
  %v160 = vld [vmem:[%s1 + $0x42c] sm:$0xff]
  %v161 = vld [vmem:[%s1 + $0x434] sm:$0xf]
  %v162 = vld [vmem:[%s1 + $0x438] sm:$0xff]
  %v163 = vld [vmem:[%s1 + $0x440] sm:$0xff]
  %v164 = vld [vmem:[%s1 + $0x448] sm:$0xff]
  %v165 = vld [vmem:[%s1 + $0x450] sm:$0xff]
  %v166 = vld [vmem:[%s1 + $0x458] sm:$0xf]
  %v167 = vld [vmem:[%s1 + $0x45c] sm:$0xff]
  %v168 = vld [vmem:[%s1 + $0x464] sm:$0xff]
  %v169 = vld [vmem:[%s1 + $0x46c] sm:$0xff]
  %v170 = vld [vmem:[%s1 + $0x474] sm:$0xff]
  %v171 = vld [vmem:[%s1 + $0x47c] sm:$0xf]
  %v172 = vld [vmem:[%s1 + $0x480] sm:$0xff]
  %v173 = vld [vmem:[%s1 + $0x488] sm:$0xff]
  %v174 = vld [vmem:[%s1 + $0x490] sm:$0xff]
  %v175 = vld [vmem:[%s1 + $0x498] sm:$0xff]
  %v176 = vld [vmem:[%s1 + $0x4a0] sm:$0xf]
  %v177 = vld [vmem:[%s1 + $0x4a4] sm:$0xff]
  %v178 = vld [vmem:[%s1 + $0x4ac] sm:$0xff]
  %v179 = vld [vmem:[%s1 + $0x4b4] sm:$0xff]
  %v180 = vld [vmem:[%s1 + $0x4bc] sm:$0xff]
  %v181 = vld [vmem:[%s1 + $0x4c4] sm:$0xf]
  %v182 = vld [vmem:[%s1 + $0x4c8] sm:$0xff]
  %v183 = vld [vmem:[%s1 + $0x4d0] sm:$0xff]
  %v184 = vld [vmem:[%s1 + $0x4d8] sm:$0xff]
  %v185 = vld [vmem:[%s1 + $0x4e0] sm:$0xff]
  %v186 = vld [vmem:[%s1 + $0x4e8] sm:$0xf]
  %v187 = vld [vmem:[%s1 + $0x4ec] sm:$0xff]
  %v188 = vld [vmem:[%s1 + $0x4f4] sm:$0xff]
  %v189 = vld [vmem:[%s1 + $0x4fc] sm:$0xff]
  %v190 = vld [vmem:[%s1 + $0x504] sm:$0xff]
  %v191 = vld [vmem:[%s1 + $0x50c] sm:$0xf]
  %v192 = vld [vmem:[%s1 + $0x510] sm:$0xff]
  %v193 = vld [vmem:[%s1 + $0x518] sm:$0xff]
  %v194 = vld [vmem:[%s1 + $0x520] sm:$0xff]
  %v195 = vld [vmem:[%s1 + $0x528] sm:$0xff]
  %v196 = vld [vmem:[%s1 + $0x530] sm:$0xf]
  %v197 = vld [vmem:[%s1 + $0x534] sm:$0xff]
  %v198 = vld [vmem:[%s1 + $0x53c] sm:$0xff]
  %v199 = vld [vmem:[%s1 + $0x544] sm:$0xff]
  %v200 = vld [vmem:[%s1 + $0x54c] sm:$0xff]
  %v201 = vld [vmem:[%s1 + $0x554] sm:$0xf]
  %v202 = vld [vmem:[%s1 + $0x558] sm:$0xff]
  %v203 = vld [vmem:[%s1 + $0x560] sm:$0xff]
  %v204 = vld [vmem:[%s1 + $0x568] sm:$0xff]
  %v205 = vld [vmem:[%s1 + $0x570] sm:$0xff]
  %v206 = vld [vmem:[%s1 + $0x578] sm:$0xf]
  %v207 = vld [vmem:[%s1 + $0x57c] sm:$0xff]
  %v208 = vld [vmem:[%s1 + $0x584] sm:$0xff]
  %v209 = vld [vmem:[%s1 + $0x58c] sm:$0xff]
  %v210 = vld [vmem:[%s1 + $0x594] sm:$0xff]
  %v211 = vld [vmem:[%s1 + $0x59c] sm:$0xf]
  %v212 = vld [vmem:[%s1 + $0x5a0] sm:$0xff]
  %v213 = vld [vmem:[%s1 + $0x5a8] sm:$0xff]
  %v214 = vld [vmem:[%s1 + $0x5b0] sm:$0xff]
  %v215 = vld [vmem:[%s1 + $0x5b8] sm:$0xff]
  %v216 = vld [vmem:[%s1 + $0x5c0] sm:$0xf]
  %v217 = vld [vmem:[%s1 + $0x5c4] sm:$0xff]
  %v218 = vld [vmem:[%s1 + $0x5cc] sm:$0xff]
  %v219 = vld [vmem:[%s1 + $0x5d4] sm:$0xff]
  %v220 = vld [vmem:[%s1 + $0x5dc] sm:$0xff]
  %v221 = vld [vmem:[%s1 + $0x5e4] sm:$0xf]
  %v222 = vld [vmem:[%s1 + $0x5e8] sm:$0xff]
  %v223 = vld [vmem:[%s1 + $0x5f0] sm:$0xff]
  %v224 = vld [vmem:[%s1 + $0x5f8] sm:$0xff]
  %v225 = vld [vmem:[%s1 + $0x600] sm:$0xff]
  %v226 = vld [vmem:[%s1 + $0x608] sm:$0xf]
  %v227 = vld [vmem:[%s1 + $0x60c] sm:$0xff]
  %v228 = vld [vmem:[%s1 + $0x614] sm:$0xff]
  %v229 = vld [vmem:[%s1 + $0x61c] sm:$0xff]
  %v230 = vld [vmem:[%s1 + $0x624] sm:$0xff]
  %v231 = vld [vmem:[%s1 + $0x62c] sm:$0xf]
  %v232 = vld [vmem:[%s1 + $0x630] sm:$0xff]
  %v233 = vld [vmem:[%s1 + $0x638] sm:$0xff]
  %v234 = vld [vmem:[%s1 + $0x640] sm:$0xff]
  %v235 = vld [vmem:[%s1 + $0x648] sm:$0xff]
  %v236 = vld [vmem:[%s1 + $0x650] sm:$0xf]
  %v237 = vld [vmem:[%s1 + $0x654] sm:$0xff]
  %v238 = vld [vmem:[%s1 + $0x65c] sm:$0xff]
  %v239 = vld [vmem:[%s1 + $0x664] sm:$0xff]
  %v240 = vld [vmem:[%s1 + $0x66c] sm:$0xff]
  %v241 = vld [vmem:[%s1 + $0x674] sm:$0xf]
  %v242 = vld [vmem:[%s1 + $0x678] sm:$0xff]
  %v243 = vld [vmem:[%s1 + $0x680] sm:$0xff]
  %v244 = vld [vmem:[%s1 + $0x688] sm:$0xff]
  %v245 = vld [vmem:[%s1 + $0x690] sm:$0xff]
  %v246 = vld [vmem:[%s1 + $0x698] sm:$0xf]
  %v247 = vld [vmem:[%s1 + $0x69c] sm:$0xff]
  %v248 = vld [vmem:[%s1 + $0x6a4] sm:$0xff]
  %v249 = vld [vmem:[%s1 + $0x6ac] sm:$0xff]
  %v250 = vld [vmem:[%s1 + $0x6b4] sm:$0xff]
  %v251 = vld [vmem:[%s1 + $0x6bc] sm:$0xf]
  %v252 = vld [vmem:[%s0] sm:$0xf]
  %v253 = vld [vmem:[%s0 + $0x4] sm:$0xf]
  %v254 = vld [vmem:[%s0 + $0x8] sm:$0xf]
  %v255 = vld [vmem:[%s0 + $0xc] sm:$0xf]
  %v256 = vld [vmem:[%s0 + $0x10] sm:$0xf]
  %v257 = vld [vmem:[%s0 + $0x14] sm:$0xf]
  %v258 = vld [vmem:[%s0 + $0x18] sm:$0xf]
  %v259 = vld [vmem:[%s0 + $0x1c] sm:$0xf]
  %v260 = vld [vmem:[%s0 + $0x20] sm:$0xf]
  %v261 = vld [vmem:[%s0 + $0x24] sm:$0xf]
  %v262 = vld [vmem:[%s0 + $0x28] sm:$0xf]
  %v263 = vld [vmem:[%s0 + $0x2c] sm:$0xf]
  %v264 = vld [vmem:[%s0 + $0x30] sm:$0xf]
  %v265 = vld [vmem:[%s0 + $0x34] sm:$0xf]
  %v266 = vld [vmem:[%s0 + $0x38] sm:$0xf]
  %v267 = vld [vmem:[%s0 + $0x3c] sm:$0xf]
  %v268 = vld [vmem:[%s0 + $0x40] sm:$0xf]
  %v269 = vld [vmem:[%s0 + $0x44] sm:$0xf]
  %v270 = vld [vmem:[%s0 + $0x48] sm:$0xf]
  %v271 = vld [vmem:[%s0 + $0x4c] sm:$0xf]
  %v272 = vld [vmem:[%s0 + $0x50] sm:$0xf]
  %v273 = vld [vmem:[%s0 + $0x54] sm:$0xf]
  %v274 = vld [vmem:[%s0 + $0x58] sm:$0xf]
  %v275 = vld [vmem:[%s0 + $0x5c] sm:$0xf]
  %v276 = vld [vmem:[%s0 + $0x60] sm:$0xf]
  %v277 = vld [vmem:[%s0 + $0x64] sm:$0xf]
  %v278 = vld [vmem:[%s0 + $0x68] sm:$0xf]
  %v279 = vld [vmem:[%s0 + $0x6c] sm:$0xf]
  %v280 = vld [vmem:[%s0 + $0x70] sm:$0xf]
  %v281 = vld [vmem:[%s0 + $0x74] sm:$0xf]
  %v282 = vld [vmem:[%s0 + $0x78] sm:$0xf]
  %v283 = vld [vmem:[%s0 + $0x7c] sm:$0xf]
  %v284 = vld [vmem:[%s0 + $0x80] sm:$0xf]
  %v285 = vld [vmem:[%s0 + $0x84] sm:$0xf]
  %v286 = vld [vmem:[%s0 + $0x88] sm:$0xf]
  %v287 = vld [vmem:[%s0 + $0x8c] sm:$0xf]
  %v288 = vld [vmem:[%s0 + $0x90] sm:$0xf]
  %v289 = vld [vmem:[%s0 + $0x94] sm:$0xf]
  %v290 = vld [vmem:[%s0 + $0x98] sm:$0xf]
  %v291 = vld [vmem:[%s0 + $0x9c] sm:$0xf]
  %v292 = vld [vmem:[%s0 + $0xa0] sm:$0xf]
  %v293 = vld [vmem:[%s0 + $0xa4] sm:$0xf]
  %v294 = vld [vmem:[%s0 + $0xa8] sm:$0xf]
  %v295 = vld [vmem:[%s0 + $0xac] sm:$0xf]
  %v296 = vld [vmem:[%s0 + $0xb0] sm:$0xf]
  %v297 = vld [vmem:[%s0 + $0xb4] sm:$0xf]
  %v298 = vld [vmem:[%s0 + $0xb8] sm:$0xf]
  %v299 = vld [vmem:[%s0 + $0xbc] sm:$0xf]
  %v300 = vld [vmem:[%s0 + $0xc0] sm:$0xf]
  %v301 = vld [vmem:[%s0 + $0xc4] sm:$0xf]
  %v302 = vld [vmem:[%s0 + $0xc8] sm:$0xf]
  %v303 = vld [vmem:[%s0 + $0xcc] sm:$0xf]
  %v304 = vld [vmem:[%s0 + $0xd0] sm:$0xf]
  %v305 = vld [vmem:[%s0 + $0xd4] sm:$0xf]
  %v306 = vld [vmem:[%s0 + $0xd8] sm:$0xf]
  %v307 = vld [vmem:[%s0 + $0xdc] sm:$0xf]
  %v308 = vld [vmem:[%s0 + $0xe0] sm:$0xf]
  %v309 = vld [vmem:[%s0 + $0xe4] sm:$0xf]
  %v310 = vld [vmem:[%s0 + $0xe8] sm:$0xf]
  %v311 = vld [vmem:[%s0 + $0xec] sm:$0xf]
  %v312 = vld [vmem:[%s0 + $0xf0] sm:$0xf]
  %v313 = vld [vmem:[%s0 + $0xf4] sm:$0xf]
  %v314 = vld [vmem:[%s0 + $0xf8] sm:$0xf]
  %v315 = vld [vmem:[%s0 + $0xfc] sm:$0xf]
  %v316 = vld [vmem:[%s0 + $0x100] sm:$0xf]
  %v317 = vld [vmem:[%s0 + $0x104] sm:$0xf]
  %v318 = vld [vmem:[%s0 + $0x108] sm:$0xf]
  %v319 = vld [vmem:[%s0 + $0x10c] sm:$0xf]
  %v320 = vld [vmem:[%s0 + $0x110] sm:$0xf]
  %v321 = vld [vmem:[%s0 + $0x114] sm:$0xf]
  %v322 = vld [vmem:[%s0 + $0x118] sm:$0xf]
  %v323 = vld [vmem:[%s0 + $0x11c] sm:$0xf]
  %v324 = vld [vmem:[%s0 + $0x120] sm:$0xf]
  %v325 = vld [vmem:[%s0 + $0x124] sm:$0xf]
  %v326 = vld [vmem:[%s0 + $0x128] sm:$0xf]
  %v327 = vld [vmem:[%s0 + $0x12c] sm:$0xf]
  %v328 = vld [vmem:[%s0 + $0x130] sm:$0xf]
  %v329 = vld [vmem:[%s0 + $0x134] sm:$0xf]
  %v330 = vld [vmem:[%s0 + $0x138] sm:$0xf]
  %v331 = vld [vmem:[%s0 + $0x13c] sm:$0xf]
  %v332 = vld [vmem:[%s0 + $0x140] sm:$0xf]
  %v333 = vld [vmem:[%s0 + $0x144] sm:$0xf]
  %v334 = vld [vmem:[%s0 + $0x148] sm:$0xf]
  %v335 = vld [vmem:[%s0 + $0x14c] sm:$0xf]
  %v336 = vld [vmem:[%s0 + $0x150] sm:$0xf]
  %v337 = vld [vmem:[%s0 + $0x154] sm:$0xf]
  %v338 = vld [vmem:[%s0 + $0x158] sm:$0xf]
  %v339 = vld [vmem:[%s0 + $0x15c] sm:$0xf]
  %v340 = vld [vmem:[%s0 + $0x160] sm:$0xf]
  %v341 = vld [vmem:[%s0 + $0x164] sm:$0xf]
  %v342 = vld [vmem:[%s0 + $0x168] sm:$0xf]
  %v343 = vld [vmem:[%s0 + $0x16c] sm:$0xf]
  %v344 = vld [vmem:[%s0 + $0x170] sm:$0xf]
  %v345 = vld [vmem:[%s0 + $0x174] sm:$0xf]
  %v346 = vld [vmem:[%s0 + $0x178] sm:$0xf]
  %v347 = vld [vmem:[%s0 + $0x17c] sm:$0xf]
  %v348 = vld [vmem:[%s0 + $0x180] sm:$0xf]
  %v349 = vld [vmem:[%s0 + $0x184] sm:$0xf]
  %v350 = vld [vmem:[%s0 + $0x188] sm:$0xf]
  %v351 = vld [vmem:[%s0 + $0x18c] sm:$0xf]
  %v352 = vld [vmem:[%s0 + $0x190] sm:$0xf]
  %v353 = vld [vmem:[%s0 + $0x194] sm:$0xf]
  %v354 = vld [vmem:[%s0 + $0x198] sm:$0xf]
  %v355 = vld [vmem:[%s0 + $0x19c] sm:$0xf]
  %v356 = vld [vmem:[%s0 + $0x1a0] sm:$0xf]
  %v357 = vld [vmem:[%s0 + $0x1a4] sm:$0xf]
  %v358 = vld [vmem:[%s0 + $0x1a8] sm:$0xf]
  %v359 = vld [vmem:[%s0 + $0x1ac] sm:$0xf]
  %v360 = vld [vmem:[%s0 + $0x1b0] sm:$0xf]
  %v361 = vld [vmem:[%s0 + $0x1b4] sm:$0xf]
  %v362 = vld [vmem:[%s0 + $0x1b8] sm:$0xf]
  %v363 = vld [vmem:[%s0 + $0x1bc] sm:$0xf]
  %v364 = vld [vmem:[%s0 + $0x1c0] sm:$0xf]
  %v365 = vld [vmem:[%s0 + $0x1c4] sm:$0xf]
  %v366 = vld [vmem:[%s0 + $0x1c8] sm:$0xf]
  %v367 = vld [vmem:[%s0 + $0x1cc] sm:$0xf]
  %v368 = vld [vmem:[%s0 + $0x1d0] sm:$0xf]
  %v369 = vld [vmem:[%s0 + $0x1d4] sm:$0xf]
  %v370 = vld [vmem:[%s0 + $0x1d8] sm:$0xf]
  %v371 = vld [vmem:[%s0 + $0x1dc] sm:$0xf]
  %v372 = vld [vmem:[%s0 + $0x1e0] sm:$0xf]
  %v373 = vld [vmem:[%s0 + $0x1e4] sm:$0xf]
  %v374 = vld [vmem:[%s0 + $0x1e8] sm:$0xf]
  %v375 = vld [vmem:[%s0 + $0x1ec] sm:$0xf]
  %v376 = vld [vmem:[%s0 + $0x1f0] sm:$0xf]
  %v377 = vld [vmem:[%s0 + $0x1f4] sm:$0xf]
  %v378 = vld [vmem:[%s0 + $0x1f8] sm:$0xf]
  %v379 = vld [vmem:[%s0 + $0x1fc] sm:$0xf]
  %v380 = vld [vmem:[%s0 + $0x200] sm:$0xf]
  %v381 = vld [vmem:[%s0 + $0x204] sm:$0xf]
  %v382 = vld [vmem:[%s0 + $0x208] sm:$0xf]
  %v383 = vld [vmem:[%s0 + $0x20c] sm:$0xf]
  %v384 = vld [vmem:[%s0 + $0x210] sm:$0xf]
  %v385 = vld [vmem:[%s0 + $0x214] sm:$0xf]
  %v386 = vld [vmem:[%s0 + $0x218] sm:$0xf]
  %v387 = vld [vmem:[%s0 + $0x21c] sm:$0xf]
  %v388 = vld [vmem:[%s0 + $0x220] sm:$0xf]
  %v389 = vld [vmem:[%s0 + $0x224] sm:$0xf]
  %v390 = vld [vmem:[%s0 + $0x228] sm:$0xf]
  %v391 = vld [vmem:[%s0 + $0x22c] sm:$0xf]
  %v392 = vld [vmem:[%s0 + $0x230] sm:$0xf]
  %v393 = vld [vmem:[%s0 + $0x234] sm:$0xf]
  %v394 = vld [vmem:[%s0 + $0x238] sm:$0xf]
  %v395 = vld [vmem:[%s0 + $0x23c] sm:$0xf]
  %v636 = vunpack.c.l.b16 %v12
  %v637 = vunpack.c.h.b16 %v12
  %v638 = vunpack.c.l.b16 %v13
  %v639 = vunpack.c.h.b16 %v13
  %v640 = vunpack.c.l.b16 %v14
  %v641 = vunpack.c.h.b16 %v14
  %v642 = vunpack.c.l.b16 %v15
  %v643 = vunpack.c.h.b16 %v15
  %v644 = vunpack.c.l.b16 %v16
  %v645 = vunpack.c.l.b16 %v17
  %v646 = vunpack.c.h.b16 %v17
  %v647 = vunpack.c.l.b16 %v18
  %v648 = vunpack.c.h.b16 %v18
  %v649 = vunpack.c.l.b16 %v19
  %v650 = vunpack.c.h.b16 %v19
  %v651 = vunpack.c.l.b16 %v20
  %v652 = vunpack.c.h.b16 %v20
  %v653 = vunpack.c.l.b16 %v21
  %v654 = vunpack.c.l.b16 %v22
  %v655 = vunpack.c.h.b16 %v22
  %v656 = vunpack.c.l.b16 %v23
  %v657 = vunpack.c.h.b16 %v23
  %v658 = vunpack.c.l.b16 %v24
  %v659 = vunpack.c.h.b16 %v24
  %v660 = vunpack.c.l.b16 %v25
  %v661 = vunpack.c.h.b16 %v25
  %v662 = vunpack.c.l.b16 %v26
  %v663 = vunpack.c.l.b16 %v27
  %v664 = vunpack.c.h.b16 %v27
  %v665 = vunpack.c.l.b16 %v28
  %v666 = vunpack.c.h.b16 %v28
  %v667 = vunpack.c.l.b16 %v29
  %v668 = vunpack.c.h.b16 %v29
  %v669 = vunpack.c.l.b16 %v30
  %v670 = vunpack.c.h.b16 %v30
  %v671 = vunpack.c.l.b16 %v31
  %v672 = vunpack.c.l.b16 %v32
  %v673 = vunpack.c.h.b16 %v32
  %v674 = vunpack.c.l.b16 %v33
  %v675 = vunpack.c.h.b16 %v33
  %v676 = vunpack.c.l.b16 %v34
  %v677 = vunpack.c.h.b16 %v34
  %v678 = vunpack.c.l.b16 %v35
  %v679 = vunpack.c.h.b16 %v35
  %v680 = vunpack.c.l.b16 %v36
  %v681 = vunpack.c.l.b16 %v37
  %v682 = vunpack.c.h.b16 %v37
  %v683 = vunpack.c.l.b16 %v38
  %v684 = vunpack.c.h.b16 %v38
  %v685 = vunpack.c.l.b16 %v39
  %v686 = vunpack.c.h.b16 %v39
  %v687 = vunpack.c.l.b16 %v40
  %v688 = vunpack.c.h.b16 %v40
  %v689 = vunpack.c.l.b16 %v41
  %v690 = vunpack.c.l.b16 %v42
  %v691 = vunpack.c.h.b16 %v42
  %v692 = vunpack.c.l.b16 %v43
  %v693 = vunpack.c.h.b16 %v43
  %v694 = vunpack.c.l.b16 %v44
  %v695 = vunpack.c.h.b16 %v44
  %v696 = vunpack.c.l.b16 %v45
  %v697 = vunpack.c.h.b16 %v45
  %v698 = vunpack.c.l.b16 %v46
  %v699 = vunpack.c.l.b16 %v47
  %v700 = vunpack.c.h.b16 %v47
  %v701 = vunpack.c.l.b16 %v48
  %v702 = vunpack.c.h.b16 %v48
  %v703 = vunpack.c.l.b16 %v49
  %v704 = vunpack.c.h.b16 %v49
  %v705 = vunpack.c.l.b16 %v50
  %v706 = vunpack.c.h.b16 %v50
  %v707 = vunpack.c.l.b16 %v51
  %v708 = vunpack.c.l.b16 %v52
  %v709 = vunpack.c.h.b16 %v52
  %v710 = vunpack.c.l.b16 %v53
  %v711 = vunpack.c.h.b16 %v53
  %v712 = vunpack.c.l.b16 %v54
  %v713 = vunpack.c.h.b16 %v54
  %v714 = vunpack.c.l.b16 %v55
  %v715 = vunpack.c.h.b16 %v55
  %v716 = vunpack.c.l.b16 %v56
  %v717 = vunpack.c.l.b16 %v57
  %v718 = vunpack.c.h.b16 %v57
  %v719 = vunpack.c.l.b16 %v58
  %v720 = vunpack.c.h.b16 %v58
  %v721 = vunpack.c.l.b16 %v59
  %v722 = vunpack.c.h.b16 %v59
  %v723 = vunpack.c.l.b16 %v60
  %v724 = vunpack.c.h.b16 %v60
  %v725 = vunpack.c.l.b16 %v61
  %v726 = vunpack.c.l.b16 %v62
  %v727 = vunpack.c.h.b16 %v62
  %v728 = vunpack.c.l.b16 %v63
  %v729 = vunpack.c.h.b16 %v63
  %v730 = vunpack.c.l.b16 %v64
  %v731 = vunpack.c.h.b16 %v64
  %v732 = vunpack.c.l.b16 %v65
  %v733 = vunpack.c.h.b16 %v65
  %v734 = vunpack.c.l.b16 %v66
  %v735 = vunpack.c.l.b16 %v67
  %v736 = vunpack.c.h.b16 %v67
  %v737 = vunpack.c.l.b16 %v68
  %v738 = vunpack.c.h.b16 %v68
  %v739 = vunpack.c.l.b16 %v69
  %v740 = vunpack.c.h.b16 %v69
  %v741 = vunpack.c.l.b16 %v70
  %v742 = vunpack.c.h.b16 %v70
  %v743 = vunpack.c.l.b16 %v71
  %v744 = vunpack.c.l.b16 %v72
  %v745 = vunpack.c.h.b16 %v72
  %v746 = vunpack.c.l.b16 %v73
  %v747 = vunpack.c.h.b16 %v73
  %v748 = vunpack.c.l.b16 %v74
  %v749 = vunpack.c.h.b16 %v74
  %v750 = vunpack.c.l.b16 %v75
  %v751 = vunpack.c.h.b16 %v75
  %v752 = vunpack.c.l.b16 %v76
  %v753 = vunpack.c.l.b16 %v77
  %v754 = vunpack.c.h.b16 %v77
  %v755 = vunpack.c.l.b16 %v78
  %v756 = vunpack.c.h.b16 %v78
  %v757 = vunpack.c.l.b16 %v79
  %v758 = vunpack.c.h.b16 %v79
  %v759 = vunpack.c.l.b16 %v80
  %v760 = vunpack.c.h.b16 %v80
  %v761 = vunpack.c.l.b16 %v81
  %v762 = vunpack.c.l.b16 %v82
  %v763 = vunpack.c.h.b16 %v82
  %v764 = vunpack.c.l.b16 %v83
  %v765 = vunpack.c.h.b16 %v83
  %v766 = vunpack.c.l.b16 %v84
  %v767 = vunpack.c.h.b16 %v84
  %v768 = vunpack.c.l.b16 %v85
  %v769 = vunpack.c.h.b16 %v85
  %v770 = vunpack.c.l.b16 %v86
  %v771 = vunpack.c.l.b16 %v87
  %v772 = vunpack.c.h.b16 %v87
  %v773 = vunpack.c.l.b16 %v88
  %v774 = vunpack.c.h.b16 %v88
  %v775 = vunpack.c.l.b16 %v89
  %v776 = vunpack.c.h.b16 %v89
  %v777 = vunpack.c.l.b16 %v90
  %v778 = vunpack.c.h.b16 %v90
  %v779 = vunpack.c.l.b16 %v91
  %v780 = vunpack.c.l.b16 %v92
  %v781 = vunpack.c.h.b16 %v92
  %v782 = vunpack.c.l.b16 %v93
  %v783 = vunpack.c.h.b16 %v93
  %v784 = vunpack.c.l.b16 %v94
  %v785 = vunpack.c.h.b16 %v94
  %v786 = vunpack.c.l.b16 %v95
  %v787 = vunpack.c.h.b16 %v95
  %v788 = vunpack.c.l.b16 %v96
  %v789 = vunpack.c.l.b16 %v97
  %v790 = vunpack.c.h.b16 %v97
  %v791 = vunpack.c.l.b16 %v98
  %v792 = vunpack.c.h.b16 %v98
  %v793 = vunpack.c.l.b16 %v99
  %v794 = vunpack.c.h.b16 %v99
  %v795 = vunpack.c.l.b16 %v100
  %v796 = vunpack.c.h.b16 %v100
  %v797 = vunpack.c.l.b16 %v101
  %v798 = vunpack.c.l.b16 %v102
  %v799 = vunpack.c.h.b16 %v102
  %v800 = vunpack.c.l.b16 %v103
  %v801 = vunpack.c.h.b16 %v103
  %v802 = vunpack.c.l.b16 %v104
  %v803 = vunpack.c.h.b16 %v104
  %v804 = vunpack.c.l.b16 %v105
  %v805 = vunpack.c.h.b16 %v105
  %v806 = vunpack.c.l.b16 %v106
  %v807 = vunpack.c.l.b16 %v107
  %v808 = vunpack.c.h.b16 %v107
  %v809 = vunpack.c.l.b16 %v108
  %v810 = vunpack.c.h.b16 %v108
  %v811 = vunpack.c.l.b16 %v109
  %v812 = vunpack.c.h.b16 %v109
  %v813 = vunpack.c.l.b16 %v110
  %v814 = vunpack.c.h.b16 %v110
  %v815 = vunpack.c.l.b16 %v111
  %v816 = vunpack.c.l.b16 %v112
  %v817 = vunpack.c.h.b16 %v112
  %v818 = vunpack.c.l.b16 %v113
  %v819 = vunpack.c.h.b16 %v113
  %v820 = vunpack.c.l.b16 %v114
  %v821 = vunpack.c.h.b16 %v114
  %v822 = vunpack.c.l.b16 %v115
  %v823 = vunpack.c.h.b16 %v115
  %v824 = vunpack.c.l.b16 %v116
  %v825 = vunpack.c.l.b16 %v117
  %v826 = vunpack.c.h.b16 %v117
  %v827 = vunpack.c.l.b16 %v118
  %v828 = vunpack.c.h.b16 %v118
  %v829 = vunpack.c.l.b16 %v119
  %v830 = vunpack.c.h.b16 %v119
  %v831 = vunpack.c.l.b16 %v120
  %v832 = vunpack.c.h.b16 %v120
  %v833 = vunpack.c.l.b16 %v121
  %v834 = vunpack.c.l.b16 %v122
  %v835 = vunpack.c.h.b16 %v122
  %v836 = vunpack.c.l.b16 %v123
  %v837 = vunpack.c.h.b16 %v123
  %v838 = vunpack.c.l.b16 %v124
  %v839 = vunpack.c.h.b16 %v124
  %v840 = vunpack.c.l.b16 %v125
  %v841 = vunpack.c.h.b16 %v125
  %v842 = vunpack.c.l.b16 %v126
  %v843 = vunpack.c.l.b16 %v127
  %v844 = vunpack.c.h.b16 %v127
  %v845 = vunpack.c.l.b16 %v128
  %v846 = vunpack.c.h.b16 %v128
  %v847 = vunpack.c.l.b16 %v129
  %v848 = vunpack.c.h.b16 %v129
  %v849 = vunpack.c.l.b16 %v130
  %v850 = vunpack.c.h.b16 %v130
  %v851 = vunpack.c.l.b16 %v131
  %v852 = vunpack.c.l.b16 %v132
  %v853 = vunpack.c.h.b16 %v132
  %v854 = vunpack.c.l.b16 %v133
  %v855 = vunpack.c.h.b16 %v133
  %v856 = vunpack.c.l.b16 %v134
  %v857 = vunpack.c.h.b16 %v134
  %v858 = vunpack.c.l.b16 %v135
  %v859 = vunpack.c.h.b16 %v135
  %v860 = vunpack.c.l.b16 %v136
  %v861 = vunpack.c.l.b16 %v137
  %v862 = vunpack.c.h.b16 %v137
  %v863 = vunpack.c.l.b16 %v138
  %v864 = vunpack.c.h.b16 %v138
  %v865 = vunpack.c.l.b16 %v139
  %v866 = vunpack.c.h.b16 %v139
  %v867 = vunpack.c.l.b16 %v140
  %v868 = vunpack.c.h.b16 %v140
  %v869 = vunpack.c.l.b16 %v141
  %v870 = vunpack.c.l.b16 %v142
  %v871 = vunpack.c.h.b16 %v142
  %v872 = vunpack.c.l.b16 %v143
  %v873 = vunpack.c.h.b16 %v143
  %v874 = vunpack.c.l.b16 %v144
  %v875 = vunpack.c.h.b16 %v144
  %v876 = vunpack.c.l.b16 %v145
  %v877 = vunpack.c.h.b16 %v145
  %v878 = vunpack.c.l.b16 %v146
  %v879 = vunpack.c.l.b16 %v147
  %v880 = vunpack.c.h.b16 %v147
  %v881 = vunpack.c.l.b16 %v148
  %v882 = vunpack.c.h.b16 %v148
  %v883 = vunpack.c.l.b16 %v149
  %v884 = vunpack.c.h.b16 %v149
  %v885 = vunpack.c.l.b16 %v150
  %v886 = vunpack.c.h.b16 %v150
  %v887 = vunpack.c.l.b16 %v151
  %v888 = vunpack.c.l.b16 %v152
  %v889 = vunpack.c.h.b16 %v152
  %v890 = vunpack.c.l.b16 %v153
  %v891 = vunpack.c.h.b16 %v153
  %v892 = vunpack.c.l.b16 %v154
  %v893 = vunpack.c.h.b16 %v154
  %v894 = vunpack.c.l.b16 %v155
  %v895 = vunpack.c.h.b16 %v155
  %v896 = vunpack.c.l.b16 %v156
  %v897 = vunpack.c.l.b16 %v157
  %v898 = vunpack.c.h.b16 %v157
  %v899 = vunpack.c.l.b16 %v158
  %v900 = vunpack.c.h.b16 %v158
  %v901 = vunpack.c.l.b16 %v159
  %v902 = vunpack.c.h.b16 %v159
  %v903 = vunpack.c.l.b16 %v160
  %v904 = vunpack.c.h.b16 %v160
  %v905 = vunpack.c.l.b16 %v161
  %v906 = vunpack.c.l.b16 %v162
  %v907 = vunpack.c.h.b16 %v162
  %v908 = vunpack.c.l.b16 %v163
  %v909 = vunpack.c.h.b16 %v163
  %v910 = vunpack.c.l.b16 %v164
  %v911 = vunpack.c.h.b16 %v164
  %v912 = vunpack.c.l.b16 %v165
  %v913 = vunpack.c.h.b16 %v165
  %v914 = vunpack.c.l.b16 %v166
  %v915 = vunpack.c.l.b16 %v167
  %v916 = vunpack.c.h.b16 %v167
  %v917 = vunpack.c.l.b16 %v168
  %v918 = vunpack.c.h.b16 %v168
  %v919 = vunpack.c.l.b16 %v169
  %v920 = vunpack.c.h.b16 %v169
  %v921 = vunpack.c.l.b16 %v170
  %v922 = vunpack.c.h.b16 %v170
  %v923 = vunpack.c.l.b16 %v171
  %v924 = vunpack.c.l.b16 %v172
  %v925 = vunpack.c.h.b16 %v172
  %v926 = vunpack.c.l.b16 %v173
  %v927 = vunpack.c.h.b16 %v173
  %v928 = vunpack.c.l.b16 %v174
  %v929 = vunpack.c.h.b16 %v174
  %v930 = vunpack.c.l.b16 %v175
  %v931 = vunpack.c.h.b16 %v175
  %v932 = vunpack.c.l.b16 %v176
  %v933 = vunpack.c.l.b16 %v177
  %v934 = vunpack.c.h.b16 %v177
  %v935 = vunpack.c.l.b16 %v178
  %v936 = vunpack.c.h.b16 %v178
  %v937 = vunpack.c.l.b16 %v179
  %v938 = vunpack.c.h.b16 %v179
  %v939 = vunpack.c.l.b16 %v180
  %v940 = vunpack.c.h.b16 %v180
  %v941 = vunpack.c.l.b16 %v181
  %v942 = vunpack.c.l.b16 %v182
  %v943 = vunpack.c.h.b16 %v182
  %v944 = vunpack.c.l.b16 %v183
  %v945 = vunpack.c.h.b16 %v183
  %v946 = vunpack.c.l.b16 %v184
  %v947 = vunpack.c.h.b16 %v184
  %v948 = vunpack.c.l.b16 %v185
  %v949 = vunpack.c.h.b16 %v185
  %v950 = vunpack.c.l.b16 %v186
  %v951 = vunpack.c.l.b16 %v187
  %v952 = vunpack.c.h.b16 %v187
  %v953 = vunpack.c.l.b16 %v188
  %v954 = vunpack.c.h.b16 %v188
  %v955 = vunpack.c.l.b16 %v189
  %v956 = vunpack.c.h.b16 %v189
  %v957 = vunpack.c.l.b16 %v190
  %v958 = vunpack.c.h.b16 %v190
  %v959 = vunpack.c.l.b16 %v191
  %v960 = vunpack.c.l.b16 %v192
  %v961 = vunpack.c.h.b16 %v192
  %v962 = vunpack.c.l.b16 %v193
  %v963 = vunpack.c.h.b16 %v193
  %v964 = vunpack.c.l.b16 %v194
  %v965 = vunpack.c.h.b16 %v194
  %v966 = vunpack.c.l.b16 %v195
  %v967 = vunpack.c.h.b16 %v195
  %v968 = vunpack.c.l.b16 %v196
  %v969 = vunpack.c.l.b16 %v197
  %v970 = vunpack.c.h.b16 %v197
  %v971 = vunpack.c.l.b16 %v198
  %v972 = vunpack.c.h.b16 %v198
  %v973 = vunpack.c.l.b16 %v199
  %v974 = vunpack.c.h.b16 %v199
  %v975 = vunpack.c.l.b16 %v200
  %v976 = vunpack.c.h.b16 %v200
  %v977 = vunpack.c.l.b16 %v201
  %v978 = vunpack.c.l.b16 %v202
  %v979 = vunpack.c.h.b16 %v202
  %v980 = vunpack.c.l.b16 %v203
  %v981 = vunpack.c.h.b16 %v203
  %v982 = vunpack.c.l.b16 %v204
  %v983 = vunpack.c.h.b16 %v204
  %v984 = vunpack.c.l.b16 %v205
  %v985 = vunpack.c.h.b16 %v205
  %v986 = vunpack.c.l.b16 %v206
  %v987 = vunpack.c.l.b16 %v207
  %v988 = vunpack.c.h.b16 %v207
  %v989 = vunpack.c.l.b16 %v208
  %v990 = vunpack.c.h.b16 %v208
  %v991 = vunpack.c.l.b16 %v209
  %v992 = vunpack.c.h.b16 %v209
  %v993 = vunpack.c.l.b16 %v210
  %v994 = vunpack.c.h.b16 %v210
  %v995 = vunpack.c.l.b16 %v211
  %v996 = vunpack.c.l.b16 %v212
  %v997 = vunpack.c.h.b16 %v212
  %v998 = vunpack.c.l.b16 %v213
  %v999 = vunpack.c.h.b16 %v213
  %v1000 = vunpack.c.l.b16 %v214
  %v1001 = vunpack.c.h.b16 %v214
  %v1002 = vunpack.c.l.b16 %v215
  %v1003 = vunpack.c.h.b16 %v215
  %v1004 = vunpack.c.l.b16 %v216
  %v1005 = vunpack.c.l.b16 %v217
  %v1006 = vunpack.c.h.b16 %v217
  %v1007 = vunpack.c.l.b16 %v218
  %v1008 = vunpack.c.h.b16 %v218
  %v1009 = vunpack.c.l.b16 %v219
  %v1010 = vunpack.c.h.b16 %v219
  %v1011 = vunpack.c.l.b16 %v220
  %v1012 = vunpack.c.h.b16 %v220
  %v1013 = vunpack.c.l.b16 %v221
  %v1014 = vunpack.c.l.b16 %v222
  %v1015 = vunpack.c.h.b16 %v222
  %v1016 = vunpack.c.l.b16 %v223
  %v1017 = vunpack.c.h.b16 %v223
  %v1018 = vunpack.c.l.b16 %v224
  %v1019 = vunpack.c.h.b16 %v224
  %v1020 = vunpack.c.l.b16 %v225
  %v1021 = vunpack.c.h.b16 %v225
  %v1022 = vunpack.c.l.b16 %v226
  %v1023 = vunpack.c.l.b16 %v227
  %v1024 = vunpack.c.h.b16 %v227
  %v1025 = vunpack.c.l.b16 %v228
  %v1026 = vunpack.c.h.b16 %v228
  %v1027 = vunpack.c.l.b16 %v229
  %v1028 = vunpack.c.h.b16 %v229
  %v1029 = vunpack.c.l.b16 %v230
  %v1030 = vunpack.c.h.b16 %v230
  %v1031 = vunpack.c.l.b16 %v231
  %v1032 = vunpack.c.l.b16 %v232
  %v1033 = vunpack.c.h.b16 %v232
  %v1034 = vunpack.c.l.b16 %v233
  %v1035 = vunpack.c.h.b16 %v233
  %v1036 = vunpack.c.l.b16 %v234
  %v1037 = vunpack.c.h.b16 %v234
  %v1038 = vunpack.c.l.b16 %v235
  %v1039 = vunpack.c.h.b16 %v235
  %v1040 = vunpack.c.l.b16 %v236
  %v1041 = vunpack.c.l.b16 %v237
  %v1042 = vunpack.c.h.b16 %v237
  %v1043 = vunpack.c.l.b16 %v238
  %v1044 = vunpack.c.h.b16 %v238
  %v1045 = vunpack.c.l.b16 %v239
  %v1046 = vunpack.c.h.b16 %v239
  %v1047 = vunpack.c.l.b16 %v240
  %v1048 = vunpack.c.h.b16 %v240
  %v1049 = vunpack.c.l.b16 %v241
  %v1050 = vunpack.c.l.b16 %v242
  %v1051 = vunpack.c.h.b16 %v242
  %v1052 = vunpack.c.l.b16 %v243
  %v1053 = vunpack.c.h.b16 %v243
  %v1054 = vunpack.c.l.b16 %v244
  %v1055 = vunpack.c.h.b16 %v244
  %v1056 = vunpack.c.l.b16 %v245
  %v1057 = vunpack.c.h.b16 %v245
  %v1058 = vunpack.c.l.b16 %v246
  %v1059 = vunpack.c.l.b16 %v247
  %v1060 = vunpack.c.h.b16 %v247
  %v1061 = vunpack.c.l.b16 %v248
  %v1062 = vunpack.c.h.b16 %v248
  %v1063 = vunpack.c.l.b16 %v249
  %v1064 = vunpack.c.h.b16 %v249
  %v1065 = vunpack.c.l.b16 %v250
  %v1066 = vunpack.c.h.b16 %v250
  %v1067 = vunpack.c.l.b16 %v251
  %v1068 = vpack.c.b16 %v645, %v636
  %v1069 = vpack.c.b16 %v646, %v637
  %v1070 = vpack.c.b16 %v647, %v638
  %v1071 = vpack.c.b16 %v648, %v639
  %v1072 = vpack.c.b16 %v649, %v640
  %v1073 = vpack.c.b16 %v650, %v641
  %v1074 = vpack.c.b16 %v651, %v642
  %v1075 = vpack.c.b16 %v652, %v643
  %v1076 = vpack.c.b16 %v653, %v644
  %v1077 = vpack.c.b16 %v663, %v654
  %v1078 = vpack.c.b16 %v664, %v655
  %v1079 = vpack.c.b16 %v665, %v656
  %v1080 = vpack.c.b16 %v666, %v657
  %v1081 = vpack.c.b16 %v667, %v658
  %v1082 = vpack.c.b16 %v668, %v659
  %v1083 = vpack.c.b16 %v669, %v660
  %v1084 = vpack.c.b16 %v670, %v661
  %v1085 = vpack.c.b16 %v671, %v662
  %v1086 = vpack.c.b16 %v681, %v672
  %v1087 = vpack.c.b16 %v682, %v673
  %v1088 = vpack.c.b16 %v683, %v674
  %v1089 = vpack.c.b16 %v684, %v675
  %v1090 = vpack.c.b16 %v685, %v676
  %v1091 = vpack.c.b16 %v686, %v677
  %v1092 = vpack.c.b16 %v687, %v678
  %v1093 = vpack.c.b16 %v688, %v679
  %v1094 = vpack.c.b16 %v689, %v680
  %v1095 = vpack.c.b16 %v699, %v690
  %v1096 = vpack.c.b16 %v700, %v691
  %v1097 = vpack.c.b16 %v701, %v692
  %v1098 = vpack.c.b16 %v702, %v693
  %v1099 = vpack.c.b16 %v703, %v694
  %v1100 = vpack.c.b16 %v704, %v695
  %v1101 = vpack.c.b16 %v705, %v696
  %v1102 = vpack.c.b16 %v706, %v697
  %v1103 = vpack.c.b16 %v707, %v698
  %v1104 = vpack.c.b16 %v717, %v708
  %v1105 = vpack.c.b16 %v718, %v709
  %v1106 = vpack.c.b16 %v719, %v710
  %v1107 = vpack.c.b16 %v720, %v711
  %v1108 = vpack.c.b16 %v721, %v712
  %v1109 = vpack.c.b16 %v722, %v713
  %v1110 = vpack.c.b16 %v723, %v714
  %v1111 = vpack.c.b16 %v724, %v715
  %v1112 = vpack.c.b16 %v725, %v716
  %v1113 = vpack.c.b16 %v735, %v726
  %v1114 = vpack.c.b16 %v736, %v727
  %v1115 = vpack.c.b16 %v737, %v728
  %v1116 = vpack.c.b16 %v738, %v729
  %v1117 = vpack.c.b16 %v739, %v730
  %v1118 = vpack.c.b16 %v740, %v731
  %v1119 = vpack.c.b16 %v741, %v732
  %v1120 = vpack.c.b16 %v742, %v733
  %v1121 = vpack.c.b16 %v743, %v734
  %v1122 = vpack.c.b16 %v753, %v744
  %v1123 = vpack.c.b16 %v754, %v745
  %v1124 = vpack.c.b16 %v755, %v746
  %v1125 = vpack.c.b16 %v756, %v747
  %v1126 = vpack.c.b16 %v757, %v748
  %v1127 = vpack.c.b16 %v758, %v749
  %v1128 = vpack.c.b16 %v759, %v750
  %v1129 = vpack.c.b16 %v760, %v751
  %v1130 = vpack.c.b16 %v761, %v752
  %v1131 = vpack.c.b16 %v771, %v762
  %v1132 = vpack.c.b16 %v772, %v763
  %v1133 = vpack.c.b16 %v773, %v764
  %v1134 = vpack.c.b16 %v774, %v765
  %v1135 = vpack.c.b16 %v775, %v766
  %v1136 = vpack.c.b16 %v776, %v767
  %v1137 = vpack.c.b16 %v777, %v768
  %v1138 = vpack.c.b16 %v778, %v769
  %v1139 = vpack.c.b16 %v779, %v770
  %v1140 = vpack.c.b16 %v789, %v780
  %v1141 = vpack.c.b16 %v790, %v781
  %v1142 = vpack.c.b16 %v791, %v782
  %v1143 = vpack.c.b16 %v792, %v783
  %v1144 = vpack.c.b16 %v793, %v784
  %v1145 = vpack.c.b16 %v794, %v785
  %v1146 = vpack.c.b16 %v795, %v786
  %v1147 = vpack.c.b16 %v796, %v787
  %v1148 = vpack.c.b16 %v797, %v788
  %v1149 = vpack.c.b16 %v807, %v798
  %v1150 = vpack.c.b16 %v808, %v799
  %v1151 = vpack.c.b16 %v809, %v800
  %v1152 = vpack.c.b16 %v810, %v801
  %v1153 = vpack.c.b16 %v811, %v802
  %v1154 = vpack.c.b16 %v812, %v803
  %v1155 = vpack.c.b16 %v813, %v804
  %v1156 = vpack.c.b16 %v814, %v805
  %v1157 = vpack.c.b16 %v815, %v806
  %v1158 = vpack.c.b16 %v825, %v816
  %v1159 = vpack.c.b16 %v826, %v817
  %v1160 = vpack.c.b16 %v827, %v818
  %v1161 = vpack.c.b16 %v828, %v819
  %v1162 = vpack.c.b16 %v829, %v820
  %v1163 = vpack.c.b16 %v830, %v821
  %v1164 = vpack.c.b16 %v831, %v822
  %v1165 = vpack.c.b16 %v832, %v823
  %v1166 = vpack.c.b16 %v833, %v824
  %v1167 = vpack.c.b16 %v843, %v834
  %v1168 = vpack.c.b16 %v844, %v835
  %v1169 = vpack.c.b16 %v845, %v836
  %v1170 = vpack.c.b16 %v846, %v837
  %v1171 = vpack.c.b16 %v847, %v838
  %v1172 = vpack.c.b16 %v848, %v839
  %v1173 = vpack.c.b16 %v849, %v840
  %v1174 = vpack.c.b16 %v850, %v841
  %v1175 = vpack.c.b16 %v851, %v842
  %v1176 = vpack.c.b16 %v861, %v852
  %v1177 = vpack.c.b16 %v862, %v853
  %v1178 = vpack.c.b16 %v863, %v854
  %v1179 = vpack.c.b16 %v864, %v855
  %v1180 = vpack.c.b16 %v865, %v856
  %v1181 = vpack.c.b16 %v866, %v857
  %v1182 = vpack.c.b16 %v867, %v858
  %v1183 = vpack.c.b16 %v868, %v859
  %v1184 = vpack.c.b16 %v869, %v860
  %v1185 = vpack.c.b16 %v879, %v870
  %v1186 = vpack.c.b16 %v880, %v871
  %v1187 = vpack.c.b16 %v881, %v872
  %v1188 = vpack.c.b16 %v882, %v873
  %v1189 = vpack.c.b16 %v883, %v874
  %v1190 = vpack.c.b16 %v884, %v875
  %v1191 = vpack.c.b16 %v885, %v876
  %v1192 = vpack.c.b16 %v886, %v877
  %v1193 = vpack.c.b16 %v887, %v878
  %v1194 = vpack.c.b16 %v897, %v888
  %v1195 = vpack.c.b16 %v898, %v889
  %v1196 = vpack.c.b16 %v899, %v890
  %v1197 = vpack.c.b16 %v900, %v891
  %v1198 = vpack.c.b16 %v901, %v892
  %v1199 = vpack.c.b16 %v902, %v893
  %v1200 = vpack.c.b16 %v903, %v894
  %v1201 = vpack.c.b16 %v904, %v895
  %v1202 = vpack.c.b16 %v905, %v896
  %v1203 = vpack.c.b16 %v915, %v906
  %v1204 = vpack.c.b16 %v916, %v907
  %v1205 = vpack.c.b16 %v917, %v908
  %v1206 = vpack.c.b16 %v918, %v909
  %v1207 = vpack.c.b16 %v919, %v910
  %v1208 = vpack.c.b16 %v920, %v911
  %v1209 = vpack.c.b16 %v921, %v912
  %v1210 = vpack.c.b16 %v922, %v913
  %v1211 = vpack.c.b16 %v923, %v914
  %v1212 = vpack.c.b16 %v933, %v924
  %v1213 = vpack.c.b16 %v934, %v925
  %v1214 = vpack.c.b16 %v935, %v926
  %v1215 = vpack.c.b16 %v936, %v927
  %v1216 = vpack.c.b16 %v937, %v928
  %v1217 = vpack.c.b16 %v938, %v929
  %v1218 = vpack.c.b16 %v939, %v930
  %v1219 = vpack.c.b16 %v940, %v931
  %v1220 = vpack.c.b16 %v941, %v932
  %v1221 = vpack.c.b16 %v951, %v942
  %v1222 = vpack.c.b16 %v952, %v943
  %v1223 = vpack.c.b16 %v953, %v944
  %v1224 = vpack.c.b16 %v954, %v945
  %v1225 = vpack.c.b16 %v955, %v946
  %v1226 = vpack.c.b16 %v956, %v947
  %v1227 = vpack.c.b16 %v957, %v948
  %v1228 = vpack.c.b16 %v958, %v949
  %v1229 = vpack.c.b16 %v959, %v950
  %v1230 = vpack.c.b16 %v969, %v960
  %v1231 = vpack.c.b16 %v970, %v961
  %v1232 = vpack.c.b16 %v971, %v962
  %v1233 = vpack.c.b16 %v972, %v963
  %v1234 = vpack.c.b16 %v973, %v964
  %v1235 = vpack.c.b16 %v974, %v965
  %v1236 = vpack.c.b16 %v975, %v966
  %v1237 = vpack.c.b16 %v976, %v967
  %v1238 = vpack.c.b16 %v977, %v968
  %v1239 = vpack.c.b16 %v987, %v978
  %v1240 = vpack.c.b16 %v988, %v979
  %v1241 = vpack.c.b16 %v989, %v980
  %v1242 = vpack.c.b16 %v990, %v981
  %v1243 = vpack.c.b16 %v991, %v982
  %v1244 = vpack.c.b16 %v992, %v983
  %v1245 = vpack.c.b16 %v993, %v984
  %v1246 = vpack.c.b16 %v994, %v985
  %v1247 = vpack.c.b16 %v995, %v986
  %v1248 = vpack.c.b16 %v1005, %v996
  %v1249 = vpack.c.b16 %v1006, %v997
  %v1250 = vpack.c.b16 %v1007, %v998
  %v1251 = vpack.c.b16 %v1008, %v999
  %v1252 = vpack.c.b16 %v1009, %v1000
  %v1253 = vpack.c.b16 %v1010, %v1001
  %v1254 = vpack.c.b16 %v1011, %v1002
  %v1255 = vpack.c.b16 %v1012, %v1003
  %v1256 = vpack.c.b16 %v1013, %v1004
  %v1257 = vpack.c.b16 %v1023, %v1014
  %v1258 = vpack.c.b16 %v1024, %v1015
  %v1259 = vpack.c.b16 %v1025, %v1016
  %v1260 = vpack.c.b16 %v1026, %v1017
  %v1261 = vpack.c.b16 %v1027, %v1018
  %v1262 = vpack.c.b16 %v1028, %v1019
  %v1263 = vpack.c.b16 %v1029, %v1020
  %v1264 = vpack.c.b16 %v1030, %v1021
  %v1265 = vpack.c.b16 %v1031, %v1022
  %v1266 = vpack.c.b16 %v1041, %v1032
  %v1267 = vpack.c.b16 %v1042, %v1033
  %v1268 = vpack.c.b16 %v1043, %v1034
  %v1269 = vpack.c.b16 %v1044, %v1035
  %v1270 = vpack.c.b16 %v1045, %v1036
  %v1271 = vpack.c.b16 %v1046, %v1037
  %v1272 = vpack.c.b16 %v1047, %v1038
  %v1273 = vpack.c.b16 %v1048, %v1039
  %v1274 = vpack.c.b16 %v1049, %v1040
  %v1275 = vpack.c.b16 %v1059, %v1050
  %v1276 = vpack.c.b16 %v1060, %v1051
  %v1277 = vpack.c.b16 %v1061, %v1052
  %v1278 = vpack.c.b16 %v1062, %v1053
  %v1279 = vpack.c.b16 %v1063, %v1054
  %v1280 = vpack.c.b16 %v1064, %v1055
  %v1281 = vpack.c.b16 %v1065, %v1056
  %v1282 = vpack.c.b16 %v1066, %v1057
  %v1283 = vpack.c.b16 %v1067, %v1058
  %v1644 = vunpack.c.l.b16 %v252
  %v1645 = vunpack.c.l.b16 %v253
  %v1646 = vunpack.c.l.b16 %v254
  %v1647 = vunpack.c.l.b16 %v255
  %v1648 = vunpack.c.l.b16 %v256
  %v1649 = vunpack.c.l.b16 %v257
  %v1650 = vunpack.c.l.b16 %v258
  %v1651 = vunpack.c.l.b16 %v259
  %v1652 = vunpack.c.l.b16 %v260
  %v1653 = vunpack.c.l.b16 %v261
  %v1654 = vunpack.c.l.b16 %v262
  %v1655 = vunpack.c.l.b16 %v263
  %v1656 = vunpack.c.l.b16 %v264
  %v1657 = vunpack.c.l.b16 %v265
  %v1658 = vunpack.c.l.b16 %v266
  %v1659 = vunpack.c.l.b16 %v267
  %v1660 = vunpack.c.l.b16 %v268
  %v1661 = vunpack.c.l.b16 %v269
  %v1662 = vunpack.c.l.b16 %v270
  %v1663 = vunpack.c.l.b16 %v271
  %v1664 = vunpack.c.l.b16 %v272
  %v1665 = vunpack.c.l.b16 %v273
  %v1666 = vunpack.c.l.b16 %v274
  %v1667 = vunpack.c.l.b16 %v275
  %v1668 = vunpack.c.l.b16 %v276
  %v1669 = vunpack.c.l.b16 %v277
  %v1670 = vunpack.c.l.b16 %v278
  %v1671 = vunpack.c.l.b16 %v279
  %v1672 = vunpack.c.l.b16 %v280
  %v1673 = vunpack.c.l.b16 %v281
  %v1674 = vunpack.c.l.b16 %v282
  %v1675 = vunpack.c.l.b16 %v283
  %v1676 = vunpack.c.l.b16 %v284
  %v1677 = vunpack.c.l.b16 %v285
  %v1678 = vunpack.c.l.b16 %v286
  %v1679 = vunpack.c.l.b16 %v287
  %v1680 = vunpack.c.l.b16 %v288
  %v1681 = vunpack.c.l.b16 %v289
  %v1682 = vunpack.c.l.b16 %v290
  %v1683 = vunpack.c.l.b16 %v291
  %v1684 = vunpack.c.l.b16 %v292
  %v1685 = vunpack.c.l.b16 %v293
  %v1686 = vunpack.c.l.b16 %v294
  %v1687 = vunpack.c.l.b16 %v295
  %v1688 = vunpack.c.l.b16 %v296
  %v1689 = vunpack.c.l.b16 %v297
  %v1690 = vunpack.c.l.b16 %v298
  %v1691 = vunpack.c.l.b16 %v299
  %v1692 = vunpack.c.l.b16 %v300
  %v1693 = vunpack.c.l.b16 %v301
  %v1694 = vunpack.c.l.b16 %v302
  %v1695 = vunpack.c.l.b16 %v303
  %v1696 = vunpack.c.l.b16 %v304
  %v1697 = vunpack.c.l.b16 %v305
  %v1698 = vunpack.c.l.b16 %v306
  %v1699 = vunpack.c.l.b16 %v307
  %v1700 = vunpack.c.l.b16 %v308
  %v1701 = vunpack.c.l.b16 %v309
  %v1702 = vunpack.c.l.b16 %v310
  %v1703 = vunpack.c.l.b16 %v311
  %v1704 = vunpack.c.l.b16 %v312
  %v1705 = vunpack.c.l.b16 %v313
  %v1706 = vunpack.c.l.b16 %v314
  %v1707 = vunpack.c.l.b16 %v315
  %v1708 = vunpack.c.l.b16 %v316
  %v1709 = vunpack.c.l.b16 %v317
  %v1710 = vunpack.c.l.b16 %v318
  %v1711 = vunpack.c.l.b16 %v319
  %v1712 = vunpack.c.l.b16 %v320
  %v1713 = vunpack.c.l.b16 %v321
  %v1714 = vunpack.c.l.b16 %v322
  %v1715 = vunpack.c.l.b16 %v323
  %v1716 = vunpack.c.l.b16 %v324
  %v1717 = vunpack.c.l.b16 %v325
  %v1718 = vunpack.c.l.b16 %v326
  %v1719 = vunpack.c.l.b16 %v327
  %v1720 = vunpack.c.l.b16 %v328
  %v1721 = vunpack.c.l.b16 %v329
  %v1722 = vunpack.c.l.b16 %v330
  %v1723 = vunpack.c.l.b16 %v331
  %v1724 = vunpack.c.l.b16 %v332
  %v1725 = vunpack.c.l.b16 %v333
  %v1726 = vunpack.c.l.b16 %v334
  %v1727 = vunpack.c.l.b16 %v335
  %v1728 = vunpack.c.l.b16 %v336
  %v1729 = vunpack.c.l.b16 %v337
  %v1730 = vunpack.c.l.b16 %v338
  %v1731 = vunpack.c.l.b16 %v339
  %v1732 = vunpack.c.l.b16 %v340
  %v1733 = vunpack.c.l.b16 %v341
  %v1734 = vunpack.c.l.b16 %v342
  %v1735 = vunpack.c.l.b16 %v343
  %v1736 = vunpack.c.l.b16 %v344
  %v1737 = vunpack.c.l.b16 %v345
  %v1738 = vunpack.c.l.b16 %v346
  %v1739 = vunpack.c.l.b16 %v347
  %v1740 = vunpack.c.l.b16 %v348
  %v1741 = vunpack.c.l.b16 %v349
  %v1742 = vunpack.c.l.b16 %v350
  %v1743 = vunpack.c.l.b16 %v351
  %v1744 = vunpack.c.l.b16 %v352
  %v1745 = vunpack.c.l.b16 %v353
  %v1746 = vunpack.c.l.b16 %v354
  %v1747 = vunpack.c.l.b16 %v355
  %v1748 = vunpack.c.l.b16 %v356
  %v1749 = vunpack.c.l.b16 %v357
  %v1750 = vunpack.c.l.b16 %v358
  %v1751 = vunpack.c.l.b16 %v359
  %v1752 = vunpack.c.l.b16 %v360
  %v1753 = vunpack.c.l.b16 %v361
  %v1754 = vunpack.c.l.b16 %v362
  %v1755 = vunpack.c.l.b16 %v363
  %v1756 = vunpack.c.l.b16 %v364
  %v1757 = vunpack.c.l.b16 %v365
  %v1758 = vunpack.c.l.b16 %v366
  %v1759 = vunpack.c.l.b16 %v367
  %v1760 = vunpack.c.l.b16 %v368
  %v1761 = vunpack.c.l.b16 %v369
  %v1762 = vunpack.c.l.b16 %v370
  %v1763 = vunpack.c.l.b16 %v371
  %v1764 = vunpack.c.l.b16 %v372
  %v1765 = vunpack.c.l.b16 %v373
  %v1766 = vunpack.c.l.b16 %v374
  %v1767 = vunpack.c.l.b16 %v375
  %v1768 = vunpack.c.l.b16 %v376
  %v1769 = vunpack.c.l.b16 %v377
  %v1770 = vunpack.c.l.b16 %v378
  %v1771 = vunpack.c.l.b16 %v379
  %v1772 = vunpack.c.l.b16 %v380
  %v1773 = vunpack.c.l.b16 %v381
  %v1774 = vunpack.c.l.b16 %v382
  %v1775 = vunpack.c.l.b16 %v383
  %v1776 = vunpack.c.l.b16 %v384
  %v1777 = vunpack.c.l.b16 %v385
  %v1778 = vunpack.c.l.b16 %v386
  %v1779 = vunpack.c.l.b16 %v387
  %v1780 = vunpack.c.l.b16 %v388
  %v1781 = vunpack.c.l.b16 %v389
  %v1782 = vunpack.c.l.b16 %v390
  %v1783 = vunpack.c.l.b16 %v391
  %v1784 = vunpack.c.l.b16 %v392
  %v1785 = vunpack.c.l.b16 %v393
  %v1786 = vunpack.c.l.b16 %v394
  %v1787 = vunpack.c.l.b16 %v395
  %v1788 = vpack.c.b16 %v1645, %v1644
  %v1789 = vpack.c.b16 %v1647, %v1646
  %v1790 = vpack.c.b16 %v1649, %v1648
  %v1791 = vpack.c.b16 %v1651, %v1650
  %v1792 = vpack.c.b16 %v1653, %v1652
  %v1793 = vpack.c.b16 %v1655, %v1654
  %v1794 = vpack.c.b16 %v1657, %v1656
  %v1795 = vpack.c.b16 %v1659, %v1658
  %v1796 = vpack.c.b16 %v1661, %v1660
  %v1797 = vpack.c.b16 %v1663, %v1662
  %v1798 = vpack.c.b16 %v1665, %v1664
  %v1799 = vpack.c.b16 %v1667, %v1666
  %v1800 = vpack.c.b16 %v1669, %v1668
  %v1801 = vpack.c.b16 %v1671, %v1670
  %v1802 = vpack.c.b16 %v1673, %v1672
  %v1803 = vpack.c.b16 %v1675, %v1674
  %v1804 = vpack.c.b16 %v1677, %v1676
  %v1805 = vpack.c.b16 %v1679, %v1678
  %v1806 = vpack.c.b16 %v1681, %v1680
  %v1807 = vpack.c.b16 %v1683, %v1682
  %v1808 = vpack.c.b16 %v1685, %v1684
  %v1809 = vpack.c.b16 %v1687, %v1686
  %v1810 = vpack.c.b16 %v1689, %v1688
  %v1811 = vpack.c.b16 %v1691, %v1690
  %v1812 = vpack.c.b16 %v1693, %v1692
  %v1813 = vpack.c.b16 %v1695, %v1694
  %v1814 = vpack.c.b16 %v1697, %v1696
  %v1815 = vpack.c.b16 %v1699, %v1698
  %v1816 = vpack.c.b16 %v1701, %v1700
  %v1817 = vpack.c.b16 %v1703, %v1702
  %v1818 = vpack.c.b16 %v1705, %v1704
  %v1819 = vpack.c.b16 %v1707, %v1706
  %v1820 = vpack.c.b16 %v1709, %v1708
  %v1821 = vpack.c.b16 %v1711, %v1710
  %v1822 = vpack.c.b16 %v1713, %v1712
  %v1823 = vpack.c.b16 %v1715, %v1714
  %v1824 = vpack.c.b16 %v1717, %v1716
  %v1825 = vpack.c.b16 %v1719, %v1718
  %v1826 = vpack.c.b16 %v1721, %v1720
  %v1827 = vpack.c.b16 %v1723, %v1722
  %v1828 = vpack.c.b16 %v1725, %v1724
  %v1829 = vpack.c.b16 %v1727, %v1726
  %v1830 = vpack.c.b16 %v1729, %v1728
  %v1831 = vpack.c.b16 %v1731, %v1730
  %v1832 = vpack.c.b16 %v1733, %v1732
  %v1833 = vpack.c.b16 %v1735, %v1734
  %v1834 = vpack.c.b16 %v1737, %v1736
  %v1835 = vpack.c.b16 %v1739, %v1738
  %v1836 = vpack.c.b16 %v1741, %v1740
  %v1837 = vpack.c.b16 %v1743, %v1742
  %v1838 = vpack.c.b16 %v1745, %v1744
  %v1839 = vpack.c.b16 %v1747, %v1746
  %v1840 = vpack.c.b16 %v1749, %v1748
  %v1841 = vpack.c.b16 %v1751, %v1750
  %v1842 = vpack.c.b16 %v1753, %v1752
  %v1843 = vpack.c.b16 %v1755, %v1754
  %v1844 = vpack.c.b16 %v1757, %v1756
  %v1845 = vpack.c.b16 %v1759, %v1758
  %v1846 = vpack.c.b16 %v1761, %v1760
  %v1847 = vpack.c.b16 %v1763, %v1762
  %v1848 = vpack.c.b16 %v1765, %v1764
  %v1849 = vpack.c.b16 %v1767, %v1766
  %v1850 = vpack.c.b16 %v1769, %v1768
  %v1851 = vpack.c.b16 %v1771, %v1770
  %v1852 = vpack.c.b16 %v1773, %v1772
  %v1853 = vpack.c.b16 %v1775, %v1774
  %v1854 = vpack.c.b16 %v1777, %v1776
  %v1855 = vpack.c.b16 %v1779, %v1778
  %v1856 = vpack.c.b16 %v1781, %v1780
  %v1857 = vpack.c.b16 %v1783, %v1782
  %v1858 = vpack.c.b16 %v1785, %v1784
  %v1859 = vpack.c.b16 %v1787, %v1786
  %1932 = vmatprep.subr.bf16.mxu0 0
  %1933 = vmatpush1.bf16.msra.mxu0 %v1788
  %1934 = vmatprep.subr.bf16.mxu0 0
  %1935 = vmatpush1.bf16.msra.mxu0 %v1789
  %1936 = vmatprep.subr.bf16.mxu0 0
  %1937 = vmatpush1.bf16.msra.mxu0 %v1790
  %1938 = vmatprep.subr.bf16.mxu0 0
  %1939 = vmatpush1.bf16.msra.mxu0 %v1791
  %1940 = vmatprep.subr.bf16.mxu0 0
  %1941 = vmatpush1.bf16.msra.mxu0 %v1792
  %1942 = vmatprep.subr.bf16.mxu0 0
  %1943 = vmatpush1.bf16.msra.mxu0 %v1793
  %1944 = vmatprep.subr.bf16.mxu0 0
  %1945 = vmatpush1.bf16.msra.mxu0 %v1794
  %1946 = vmatprep.subr.bf16.mxu0 0
  %1947 = vmatpush1.bf16.msra.mxu0 %v1795
  %1948 = vmatprep.subr.bf16.mxu0 0
  %1949 = vmatpush1.bf16.msra.mxu0 %v1796
  %1950 = vmatprep.subr.bf16.mxu0 0
  %1951 = vmatpush1.bf16.msra.mxu0 %v1797
  %1952 = vmatprep.subr.bf16.mxu0 0
  %1953 = vmatpush1.bf16.msra.mxu0 %v1798
  %1954 = vmatprep.subr.bf16.mxu0 0
  %1955 = vmatpush1.bf16.msra.mxu0 %v1799
  %1956 = vmatprep.subr.bf16.mxu0 0
  %1957 = vmatpush1.bf16.msra.mxu0 %v1800
  %1958 = vmatprep.subr.bf16.mxu0 0
  %1959 = vmatpush1.bf16.msra.mxu0 %v1801
  %1960 = vmatprep.subr.bf16.mxu0 0
  %1961 = vmatpush1.bf16.msra.mxu0 %v1802
  %1962 = vmatprep.subr.bf16.mxu0 0
  %1963 = vmatpush1.bf16.msra.mxu0 %v1803
  %1964 = vmatprep.mubr.bf16.mxu0 %v1069
  %1965 = vmatmul.mubr.bf16.gmra.mrb[0].mxu0 %v1068
  %v1966 = vpop.f32.mrb[0].mxu0
  %v1967 = vadd.f32 0.0, %v1966
  %v1968 = vpop.f32.mrb[0].mxu0
  %v1969 = vpop.f32.mrb[0].mxu0
  %v1970 = vadd.f32 0.0, %v1969
  %v1971 = vpop.f32.mrb[0].mxu0
  %1972 = vmatprep.mubr.bf16.mxu0 %v1078
  %1973 = vmatmul.mubr.bf16.gmra.mrb[0].mxu0 %v1077
  %v1974 = vpop.f32.mrb[0].mxu0
  %v1975 = vadd.f32 0.0, %v1974
  %v1976 = vpop.f32.mrb[0].mxu0
  %v1977 = vpop.f32.mrb[0].mxu0
  %v1978 = vadd.f32 0.0, %v1977
  %v1979 = vpop.f32.mrb[0].mxu0
  %1980 = vmatprep.mubr.bf16.mxu0 %v1087
  %1981 = vmatmul.mubr.bf16.gmra.mrb[0].mxu0 %v1086
  %v1982 = vpop.f32.mrb[0].mxu0
  %v1983 = vadd.f32 0.0, %v1982
  %v1984 = vpop.f32.mrb[0].mxu0
  %v1985 = vpop.f32.mrb[0].mxu0
  %v1986 = vadd.f32 0.0, %v1985
  %v1987 = vpop.f32.mrb[0].mxu0
  %1988 = vmatprep.mubr.bf16.mxu0 %v1096
  %1989 = vmatmul.mubr.bf16.gmra.mrb[0].mxu0 %v1095
  %v1990 = vpop.f32.mrb[0].mxu0
  %v1991 = vadd.f32 0.0, %v1990
  %v1992 = vpop.f32.mrb[0].mxu0
  %v1993 = vpop.f32.mrb[0].mxu0
  %v1994 = vadd.f32 0.0, %v1993
  %v1995 = vpop.f32.mrb[0].mxu0
  %1996 = vmatprep.mubr.bf16.mxu0 %v1105
  %1997 = vmatmul.mubr.bf16.gmra.mrb[0].mxu0 %v1104
  %v1998 = vpop.f32.mrb[0].mxu0
  %v1999 = vadd.f32 0.0, %v1998
  %v2000 = vpop.f32.mrb[0].mxu0
  %v2001 = vpop.f32.mrb[0].mxu0
  %v2002 = vadd.f32 0.0, %v2001
  %v2003 = vpop.f32.mrb[0].mxu0
  %2004 = vmatprep.mubr.bf16.mxu0 %v1114
  %2005 = vmatmul.mubr.bf16.gmra.mrb[0].mxu0 %v1113
  %v2006 = vpop.f32.mrb[0].mxu0
  %v2007 = vadd.f32 0.0, %v2006
  %v2008 = vpop.f32.mrb[0].mxu0
  %v2009 = vpop.f32.mrb[0].mxu0
  %v2010 = vadd.f32 0.0, %v2009
  %v2011 = vpop.f32.mrb[0].mxu0
  %2012 = vmatprep.mubr.bf16.mxu0 %v1123
  %2013 = vmatmul.mubr.bf16.gmra.mrb[0].mxu0 %v1122
  %v2014 = vpop.f32.mrb[0].mxu0
  %v2015 = vadd.f32 0.0, %v2014
  %v2016 = vpop.f32.mrb[0].mxu0
  %v2017 = vpop.f32.mrb[0].mxu0
  %v2018 = vadd.f32 0.0, %v2017
  %v2019 = vpop.f32.mrb[0].mxu0
  %2020 = vmatprep.mubr.bf16.mxu0 %v1132
  %2021 = vmatmul.mubr.bf16.gmra.mrb[0].mxu0 %v1131
  %v2022 = vpop.f32.mrb[0].mxu0
  %v2023 = vadd.f32 0.0, %v2022
  %v2024 = vpop.f32.mrb[0].mxu0
  %v2025 = vpop.f32.mrb[0].mxu0
  %v2026 = vadd.f32 0.0, %v2025
  %v2027 = vpop.f32.mrb[0].mxu0
  %2028 = vmatprep.mubr.bf16.mxu0 %v1141
  %2029 = vmatmul.mubr.bf16.gmra.mrb[0].mxu0 %v1140
  %v2030 = vpop.f32.mrb[0].mxu0
  %v2031 = vadd.f32 0.0, %v2030
  %v2032 = vpop.f32.mrb[0].mxu0
  %v2033 = vpop.f32.mrb[0].mxu0
  %v2034 = vadd.f32 0.0, %v2033
  %v2035 = vpop.f32.mrb[0].mxu0
  %2036 = vmatprep.mubr.bf16.mxu0 %v1150
  %2037 = vmatmul.mubr.bf16.gmra.mrb[0].mxu0 %v1149
  %v2038 = vpop.f32.mrb[0].mxu0
  %v2039 = vadd.f32 0.0, %v2038
  %v2040 = vpop.f32.mrb[0].mxu0
  %v2041 = vpop.f32.mrb[0].mxu0
  %v2042 = vadd.f32 0.0, %v2041
  %v2043 = vpop.f32.mrb[0].mxu0
  %2044 = vmatprep.mubr.bf16.mxu0 %v1159
  %2045 = vmatmul.mubr.bf16.gmra.mrb[0].mxu0 %v1158
  %v2046 = vpop.f32.mrb[0].mxu0
  %v2047 = vadd.f32 0.0, %v2046
  %v2048 = vpop.f32.mrb[0].mxu0
  %v2049 = vpop.f32.mrb[0].mxu0
  %v2050 = vadd.f32 0.0, %v2049
  %v2051 = vpop.f32.mrb[0].mxu0
  %2052 = vmatprep.mubr.bf16.mxu0 %v1168
  %2053 = vmatmul.mubr.bf16.gmra.mrb[0].mxu0 %v1167
  %v2054 = vpop.f32.mrb[0].mxu0
  %v2055 = vadd.f32 0.0, %v2054
  %v2056 = vpop.f32.mrb[0].mxu0
  %v2057 = vpop.f32.mrb[0].mxu0
  %v2058 = vadd.f32 0.0, %v2057
  %v2059 = vpop.f32.mrb[0].mxu0
  %2060 = vmatprep.mubr.bf16.mxu0 %v1177
  %2061 = vmatmul.mubr.bf16.gmra.mrb[0].mxu0 %v1176
  %v2062 = vpop.f32.mrb[0].mxu0
  %v2063 = vadd.f32 0.0, %v2062
  %v2064 = vpop.f32.mrb[0].mxu0
  %v2065 = vpop.f32.mrb[0].mxu0
  %v2066 = vadd.f32 0.0, %v2065
  %v2067 = vpop.f32.mrb[0].mxu0
  %2068 = vmatprep.mubr.bf16.mxu0 %v1186
  %2069 = vmatmul.mubr.bf16.gmra.mrb[0].mxu0 %v1185
  %v2070 = vpop.f32.mrb[0].mxu0
  %v2071 = vadd.f32 0.0, %v2070
  %v2072 = vpop.f32.mrb[0].mxu0
  %v2073 = vpop.f32.mrb[0].mxu0
  %v2074 = vadd.f32 0.0, %v2073
  %v2075 = vpop.f32.mrb[0].mxu0
  %2076 = vmatprep.mubr.bf16.mxu0 %v1195
  %2077 = vmatmul.mubr.bf16.gmra.mrb[0].mxu0 %v1194
  %v2078 = vpop.f32.mrb[0].mxu0
  %v2079 = vadd.f32 0.0, %v2078
  %v2080 = vpop.f32.mrb[0].mxu0
  %v2081 = vpop.f32.mrb[0].mxu0
  %v2082 = vadd.f32 0.0, %v2081
  %v2083 = vpop.f32.mrb[0].mxu0
  %2084 = vmatprep.mubr.bf16.mxu0 %v1204
  %2085 = vmatmul.mubr.bf16.gmra.mrb[0].mxu0 %v1203
  %v2086 = vpop.f32.mrb[0].mxu0
  %v2087 = vadd.f32 0.0, %v2086
  %v2088 = vpop.f32.mrb[0].mxu0
  %v2089 = vpop.f32.mrb[0].mxu0
  %v2090 = vadd.f32 0.0, %v2089
  %v2091 = vpop.f32.mrb[0].mxu0
  %2092 = vmatprep.mubr.bf16.mxu0 %v1213
  %2093 = vmatmul.mubr.bf16.gmra.mrb[0].mxu0 %v1212
  %v2094 = vpop.f32.mrb[0].mxu0
  %v2095 = vadd.f32 0.0, %v2094
  %v2096 = vpop.f32.mrb[0].mxu0
  %v2097 = vpop.f32.mrb[0].mxu0
  %v2098 = vadd.f32 0.0, %v2097
  %v2099 = vpop.f32.mrb[0].mxu0
  %2100 = vmatprep.mubr.bf16.mxu0 %v1222
  %2101 = vmatmul.mubr.bf16.gmra.mrb[0].mxu0 %v1221
  %v2102 = vpop.f32.mrb[0].mxu0
  %v2103 = vadd.f32 0.0, %v2102
  %v2104 = vpop.f32.mrb[0].mxu0
  %v2105 = vpop.f32.mrb[0].mxu0
  %v2106 = vadd.f32 0.0, %v2105
  %v2107 = vpop.f32.mrb[0].mxu0
  %2108 = vmatprep.mubr.bf16.mxu0 %v1231
  %2109 = vmatmul.mubr.bf16.gmra.mrb[0].mxu0 %v1230
  %v2110 = vpop.f32.mrb[0].mxu0
  %v2111 = vadd.f32 0.0, %v2110
  %v2112 = vpop.f32.mrb[0].mxu0
  %v2113 = vpop.f32.mrb[0].mxu0
  %v2114 = vadd.f32 0.0, %v2113
  %v2115 = vpop.f32.mrb[0].mxu0
  %2116 = vmatprep.mubr.bf16.mxu0 %v1240
  %2117 = vmatmul.mubr.bf16.gmra.mrb[0].mxu0 %v1239
  %v2118 = vpop.f32.mrb[0].mxu0
  %v2119 = vadd.f32 0.0, %v2118
  %v2120 = vpop.f32.mrb[0].mxu0
  %v2121 = vpop.f32.mrb[0].mxu0
  %v2122 = vadd.f32 0.0, %v2121
  %v2123 = vpop.f32.mrb[0].mxu0
  %2124 = vmatprep.mubr.bf16.mxu0 %v1249
  %2125 = vmatmul.mubr.bf16.gmra.mrb[0].mxu0 %v1248
  %v2126 = vpop.f32.mrb[0].mxu0
  %v2127 = vadd.f32 0.0, %v2126
  %v2128 = vpop.f32.mrb[0].mxu0
  %v2129 = vpop.f32.mrb[0].mxu0
  %v2130 = vadd.f32 0.0, %v2129
  %v2131 = vpop.f32.mrb[0].mxu0
  %2132 = vmatprep.mubr.bf16.mxu0 %v1258
  %2133 = vmatmul.mubr.bf16.gmra.mrb[0].mxu0 %v1257
  %v2134 = vpop.f32.mrb[0].mxu0
  %v2135 = vadd.f32 0.0, %v2134
  %v2136 = vpop.f32.mrb[0].mxu0
  %v2137 = vpop.f32.mrb[0].mxu0
  %v2138 = vadd.f32 0.0, %v2137
  %v2139 = vpop.f32.mrb[0].mxu0
  %2140 = vmatprep.mubr.bf16.mxu0 %v1267
  %2141 = vmatmul.mubr.bf16.gmra.mrb[0].mxu0 %v1266
  %v2142 = vpop.f32.mrb[0].mxu0
  %v2143 = vadd.f32 0.0, %v2142
  %v2144 = vpop.f32.mrb[0].mxu0
  %v2145 = vpop.f32.mrb[0].mxu0
  %v2146 = vadd.f32 0.0, %v2145
  %v2147 = vpop.f32.mrb[0].mxu0
  %2148 = vmatprep.mubr.bf16.mxu0 %v1276
  %2149 = vmatmul.mubr.bf16.gmra.mrb[0].mxu0 %v1275
  %v2150 = vpop.f32.mrb[0].mxu0
  %v2151 = vadd.f32 0.0, %v2150
  %v2152 = vpop.f32.mrb[0].mxu0
  %v2153 = vpop.f32.mrb[0].mxu0
  %v2154 = vadd.f32 0.0, %v2153
  %v2155 = vpop.f32.mrb[0].mxu0
  %2156 = vdwg.mxu0
  %2157 = vmatprep.subr.bf16.mxu0 0
  %2158 = vmatpush1.bf16.msra.mxu0 %v1804
  %2159 = vmatprep.subr.bf16.mxu0 0
  %2160 = vmatpush1.bf16.msra.mxu0 %v1805
  %2161 = vmatprep.subr.bf16.mxu0 0
  %2162 = vmatpush1.bf16.msra.mxu0 %v1806
  %2163 = vmatprep.subr.bf16.mxu0 0
  %2164 = vmatpush1.bf16.msra.mxu0 %v1807
  %2165 = vmatprep.subr.bf16.mxu0 0
  %2166 = vmatpush1.bf16.msra.mxu0 %v1808
  %2167 = vmatprep.subr.bf16.mxu0 0
  %2168 = vmatpush1.bf16.msra.mxu0 %v1809
  %2169 = vmatprep.subr.bf16.mxu0 0
  %2170 = vmatpush1.bf16.msra.mxu0 %v1810
  %2171 = vmatprep.subr.bf16.mxu0 0
  %2172 = vmatpush1.bf16.msra.mxu0 %v1811
  %2173 = vmatprep.subr.bf16.mxu0 0
  %2174 = vmatpush1.bf16.msra.mxu0 %v1812
  %2175 = vmatprep.subr.bf16.mxu0 0
  %2176 = vmatpush1.bf16.msra.mxu0 %v1813
  %2177 = vmatprep.subr.bf16.mxu0 0
  %2178 = vmatpush1.bf16.msra.mxu0 %v1814
  %2179 = vmatprep.subr.bf16.mxu0 0
  %2180 = vmatpush1.bf16.msra.mxu0 %v1815
  %2181 = vmatprep.subr.bf16.mxu0 0
  %2182 = vmatpush1.bf16.msra.mxu0 %v1816
  %2183 = vmatprep.subr.bf16.mxu0 0
  %2184 = vmatpush1.bf16.msra.mxu0 %v1817
  %2185 = vmatprep.subr.bf16.mxu0 0
  %2186 = vmatpush1.bf16.msra.mxu0 %v1818
  %2187 = vmatprep.subr.bf16.mxu0 0
  %2188 = vmatpush1.bf16.msra.mxu0 %v1819
  %2189 = vmatprep.mubr.bf16.mxu0 %v1071
  %2190 = vmatmul.mubr.bf16.gmra.mrb[0].mxu0 %v1070
  %v2191 = vpop.f32.mrb[0].mxu0
  %v2192 = vadd.f32 %v1967, %v2191
  %v2193 = vpop.f32.mrb[0].mxu0
  %v2194 = vpop.f32.mrb[0].mxu0
  %v2195 = vadd.f32 %v1970, %v2194
  %v2196 = vpop.f32.mrb[0].mxu0
  %2197 = vmatprep.mubr.bf16.mxu0 %v1080
  %2198 = vmatmul.mubr.bf16.gmra.mrb[0].mxu0 %v1079
  %v2199 = vpop.f32.mrb[0].mxu0
  %v2200 = vadd.f32 %v1975, %v2199
  %v2201 = vpop.f32.mrb[0].mxu0
  %v2202 = vpop.f32.mrb[0].mxu0
  %v2203 = vadd.f32 %v1978, %v2202
  %v2204 = vpop.f32.mrb[0].mxu0
  %2205 = vmatprep.mubr.bf16.mxu0 %v1089
  %2206 = vmatmul.mubr.bf16.gmra.mrb[0].mxu0 %v1088
  %v2207 = vpop.f32.mrb[0].mxu0
  %v2208 = vadd.f32 %v1983, %v2207
  %v2209 = vpop.f32.mrb[0].mxu0
  %v2210 = vpop.f32.mrb[0].mxu0
  %v2211 = vadd.f32 %v1986, %v2210
  %v2212 = vpop.f32.mrb[0].mxu0
  %2213 = vmatprep.mubr.bf16.mxu0 %v1098
  %2214 = vmatmul.mubr.bf16.gmra.mrb[0].mxu0 %v1097
  %v2215 = vpop.f32.mrb[0].mxu0
  %v2216 = vadd.f32 %v1991, %v2215
  %v2217 = vpop.f32.mrb[0].mxu0
  %v2218 = vpop.f32.mrb[0].mxu0
  %v2219 = vadd.f32 %v1994, %v2218
  %v2220 = vpop.f32.mrb[0].mxu0
  %2221 = vmatprep.mubr.bf16.mxu0 %v1107
  %2222 = vmatmul.mubr.bf16.gmra.mrb[0].mxu0 %v1106
  %v2223 = vpop.f32.mrb[0].mxu0
  %v2224 = vadd.f32 %v1999, %v2223
  %v2225 = vpop.f32.mrb[0].mxu0
  %v2226 = vpop.f32.mrb[0].mxu0
  %v2227 = vadd.f32 %v2002, %v2226
  %v2228 = vpop.f32.mrb[0].mxu0
  %2229 = vmatprep.mubr.bf16.mxu0 %v1116
  %2230 = vmatmul.mubr.bf16.gmra.mrb[0].mxu0 %v1115
  %v2231 = vpop.f32.mrb[0].mxu0
  %v2232 = vadd.f32 %v2007, %v2231
  %v2233 = vpop.f32.mrb[0].mxu0
  %v2234 = vpop.f32.mrb[0].mxu0
  %v2235 = vadd.f32 %v2010, %v2234
  %v2236 = vpop.f32.mrb[0].mxu0
  %2237 = vmatprep.mubr.bf16.mxu0 %v1125
  %2238 = vmatmul.mubr.bf16.gmra.mrb[0].mxu0 %v1124
  %v2239 = vpop.f32.mrb[0].mxu0
  %v2240 = vadd.f32 %v2015, %v2239
  %v2241 = vpop.f32.mrb[0].mxu0
  %v2242 = vpop.f32.mrb[0].mxu0
  %v2243 = vadd.f32 %v2018, %v2242
  %v2244 = vpop.f32.mrb[0].mxu0
  %2245 = vmatprep.mubr.bf16.mxu0 %v1134
  %2246 = vmatmul.mubr.bf16.gmra.mrb[0].mxu0 %v1133
  %v2247 = vpop.f32.mrb[0].mxu0
  %v2248 = vadd.f32 %v2023, %v2247
  %v2249 = vpop.f32.mrb[0].mxu0
  %v2250 = vpop.f32.mrb[0].mxu0
  %v2251 = vadd.f32 %v2026, %v2250
  %v2252 = vpop.f32.mrb[0].mxu0
  %2253 = vmatprep.mubr.bf16.mxu0 %v1143
  %2254 = vmatmul.mubr.bf16.gmra.mrb[0].mxu0 %v1142
  %v2255 = vpop.f32.mrb[0].mxu0
  %v2256 = vadd.f32 %v2031, %v2255
  %v2257 = vpop.f32.mrb[0].mxu0
  %v2258 = vpop.f32.mrb[0].mxu0
  %v2259 = vadd.f32 %v2034, %v2258
  %v2260 = vpop.f32.mrb[0].mxu0
  %2261 = vmatprep.mubr.bf16.mxu0 %v1152
  %2262 = vmatmul.mubr.bf16.gmra.mrb[0].mxu0 %v1151
  %v2263 = vpop.f32.mrb[0].mxu0
  %v2264 = vadd.f32 %v2039, %v2263
  %v2265 = vpop.f32.mrb[0].mxu0
  %v2266 = vpop.f32.mrb[0].mxu0
  %v2267 = vadd.f32 %v2042, %v2266
  %v2268 = vpop.f32.mrb[0].mxu0
  %2269 = vmatprep.mubr.bf16.mxu0 %v1161
  %2270 = vmatmul.mubr.bf16.gmra.mrb[0].mxu0 %v1160
  %v2271 = vpop.f32.mrb[0].mxu0
  %v2272 = vadd.f32 %v2047, %v2271
  %v2273 = vpop.f32.mrb[0].mxu0
  %v2274 = vpop.f32.mrb[0].mxu0
  %v2275 = vadd.f32 %v2050, %v2274
  %v2276 = vpop.f32.mrb[0].mxu0
  %2277 = vmatprep.mubr.bf16.mxu0 %v1170
  %2278 = vmatmul.mubr.bf16.gmra.mrb[0].mxu0 %v1169
  %v2279 = vpop.f32.mrb[0].mxu0
  %v2280 = vadd.f32 %v2055, %v2279
  %v2281 = vpop.f32.mrb[0].mxu0
  %v2282 = vpop.f32.mrb[0].mxu0
  %v2283 = vadd.f32 %v2058, %v2282
  %v2284 = vpop.f32.mrb[0].mxu0
  %2285 = vmatprep.mubr.bf16.mxu0 %v1179
  %2286 = vmatmul.mubr.bf16.gmra.mrb[0].mxu0 %v1178
  %v2287 = vpop.f32.mrb[0].mxu0
  %v2288 = vadd.f32 %v2063, %v2287
  %v2289 = vpop.f32.mrb[0].mxu0
  %v2290 = vpop.f32.mrb[0].mxu0
  %v2291 = vadd.f32 %v2066, %v2290
  %v2292 = vpop.f32.mrb[0].mxu0
  %2293 = vmatprep.mubr.bf16.mxu0 %v1188
  %2294 = vmatmul.mubr.bf16.gmra.mrb[0].mxu0 %v1187
  %v2295 = vpop.f32.mrb[0].mxu0
  %v2296 = vadd.f32 %v2071, %v2295
  %v2297 = vpop.f32.mrb[0].mxu0
  %v2298 = vpop.f32.mrb[0].mxu0
  %v2299 = vadd.f32 %v2074, %v2298
  %v2300 = vpop.f32.mrb[0].mxu0
  %2301 = vmatprep.mubr.bf16.mxu0 %v1197
  %2302 = vmatmul.mubr.bf16.gmra.mrb[0].mxu0 %v1196
  %v2303 = vpop.f32.mrb[0].mxu0
  %v2304 = vadd.f32 %v2079, %v2303
  %v2305 = vpop.f32.mrb[0].mxu0
  %v2306 = vpop.f32.mrb[0].mxu0
  %v2307 = vadd.f32 %v2082, %v2306
  %v2308 = vpop.f32.mrb[0].mxu0
  %2309 = vmatprep.mubr.bf16.mxu0 %v1206
  %2310 = vmatmul.mubr.bf16.gmra.mrb[0].mxu0 %v1205
  %v2311 = vpop.f32.mrb[0].mxu0
  %v2312 = vadd.f32 %v2087, %v2311
  %v2313 = vpop.f32.mrb[0].mxu0
  %v2314 = vpop.f32.mrb[0].mxu0
  %v2315 = vadd.f32 %v2090, %v2314
  %v2316 = vpop.f32.mrb[0].mxu0
  %2317 = vmatprep.mubr.bf16.mxu0 %v1215
  %2318 = vmatmul.mubr.bf16.gmra.mrb[0].mxu0 %v1214
  %v2319 = vpop.f32.mrb[0].mxu0
  %v2320 = vadd.f32 %v2095, %v2319
  %v2321 = vpop.f32.mrb[0].mxu0
  %v2322 = vpop.f32.mrb[0].mxu0
  %v2323 = vadd.f32 %v2098, %v2322
  %v2324 = vpop.f32.mrb[0].mxu0
  %2325 = vmatprep.mubr.bf16.mxu0 %v1224
  %2326 = vmatmul.mubr.bf16.gmra.mrb[0].mxu0 %v1223
  %v2327 = vpop.f32.mrb[0].mxu0
  %v2328 = vadd.f32 %v2103, %v2327
  %v2329 = vpop.f32.mrb[0].mxu0
  %v2330 = vpop.f32.mrb[0].mxu0
  %v2331 = vadd.f32 %v2106, %v2330
  %v2332 = vpop.f32.mrb[0].mxu0
  %2333 = vmatprep.mubr.bf16.mxu0 %v1233
  %2334 = vmatmul.mubr.bf16.gmra.mrb[0].mxu0 %v1232
  %v2335 = vpop.f32.mrb[0].mxu0
  %v2336 = vadd.f32 %v2111, %v2335
  %v2337 = vpop.f32.mrb[0].mxu0
  %v2338 = vpop.f32.mrb[0].mxu0
  %v2339 = vadd.f32 %v2114, %v2338
  %v2340 = vpop.f32.mrb[0].mxu0
  %2341 = vmatprep.mubr.bf16.mxu0 %v1242
  %2342 = vmatmul.mubr.bf16.gmra.mrb[0].mxu0 %v1241
  %v2343 = vpop.f32.mrb[0].mxu0
  %v2344 = vadd.f32 %v2119, %v2343
  %v2345 = vpop.f32.mrb[0].mxu0
  %v2346 = vpop.f32.mrb[0].mxu0
  %v2347 = vadd.f32 %v2122, %v2346
  %v2348 = vpop.f32.mrb[0].mxu0
  %2349 = vmatprep.mubr.bf16.mxu0 %v1251
  %2350 = vmatmul.mubr.bf16.gmra.mrb[0].mxu0 %v1250
  %v2351 = vpop.f32.mrb[0].mxu0
  %v2352 = vadd.f32 %v2127, %v2351
  %v2353 = vpop.f32.mrb[0].mxu0
  %v2354 = vpop.f32.mrb[0].mxu0
  %v2355 = vadd.f32 %v2130, %v2354
  %v2356 = vpop.f32.mrb[0].mxu0
  %2357 = vmatprep.mubr.bf16.mxu0 %v1260
  %2358 = vmatmul.mubr.bf16.gmra.mrb[0].mxu0 %v1259
  %v2359 = vpop.f32.mrb[0].mxu0
  %v2360 = vadd.f32 %v2135, %v2359
  %v2361 = vpop.f32.mrb[0].mxu0
  %v2362 = vpop.f32.mrb[0].mxu0
  %v2363 = vadd.f32 %v2138, %v2362
  %v2364 = vpop.f32.mrb[0].mxu0
  %2365 = vmatprep.mubr.bf16.mxu0 %v1269
  %2366 = vmatmul.mubr.bf16.gmra.mrb[0].mxu0 %v1268
  %v2367 = vpop.f32.mrb[0].mxu0
  %v2368 = vadd.f32 %v2143, %v2367
  %v2369 = vpop.f32.mrb[0].mxu0
  %v2370 = vpop.f32.mrb[0].mxu0
  %v2371 = vadd.f32 %v2146, %v2370
  %v2372 = vpop.f32.mrb[0].mxu0
  %2373 = vmatprep.mubr.bf16.mxu0 %v1278
  %2374 = vmatmul.mubr.bf16.gmra.mrb[0].mxu0 %v1277
  %v2375 = vpop.f32.mrb[0].mxu0
  %v2376 = vadd.f32 %v2151, %v2375
  %v2377 = vpop.f32.mrb[0].mxu0
  %v2378 = vpop.f32.mrb[0].mxu0
  %v2379 = vadd.f32 %v2154, %v2378
  %v2380 = vpop.f32.mrb[0].mxu0
  %2381 = vdwg.mxu0
  %2382 = vmatprep.subr.bf16.mxu0 0
  %2383 = vmatpush1.bf16.msra.mxu0 %v1820
  %2384 = vmatprep.subr.bf16.mxu0 0
  %2385 = vmatpush1.bf16.msra.mxu0 %v1821
  %2386 = vmatprep.subr.bf16.mxu0 0
  %2387 = vmatpush1.bf16.msra.mxu0 %v1822
  %2388 = vmatprep.subr.bf16.mxu0 0
  %2389 = vmatpush1.bf16.msra.mxu0 %v1823
  %2390 = vmatprep.subr.bf16.mxu0 0
  %2391 = vmatpush1.bf16.msra.mxu0 %v1824
  %2392 = vmatprep.subr.bf16.mxu0 0
  %2393 = vmatpush1.bf16.msra.mxu0 %v1825
  %2394 = vmatprep.subr.bf16.mxu0 0
  %2395 = vmatpush1.bf16.msra.mxu0 %v1826
  %2396 = vmatprep.subr.bf16.mxu0 0
  %2397 = vmatpush1.bf16.msra.mxu0 %v1827
  %2398 = vmatprep.subr.bf16.mxu0 0
  %2399 = vmatpush1.bf16.msra.mxu0 %v1828
  %2400 = vmatprep.subr.bf16.mxu0 0
  %2401 = vmatpush1.bf16.msra.mxu0 %v1829
  %2402 = vmatprep.subr.bf16.mxu0 0
  %2403 = vmatpush1.bf16.msra.mxu0 %v1830
  %2404 = vmatprep.subr.bf16.mxu0 0
  %2405 = vmatpush1.bf16.msra.mxu0 %v1831
  %2406 = vmatprep.subr.bf16.mxu0 0
  %2407 = vmatpush1.bf16.msra.mxu0 %v1832
  %2408 = vmatprep.subr.bf16.mxu0 0
  %2409 = vmatpush1.bf16.msra.mxu0 %v1833
  %2410 = vmatprep.subr.bf16.mxu0 0
  %2411 = vmatpush1.bf16.msra.mxu0 %v1834
  %2412 = vmatprep.subr.bf16.mxu0 0
  %2413 = vmatpush1.bf16.msra.mxu0 %v1835
  %2414 = vmatprep.mubr.bf16.mxu0 %v1073
  %2415 = vmatmul.mubr.bf16.gmra.mrb[0].mxu0 %v1072
  %v2416 = vpop.f32.mrb[0].mxu0
  %v2417 = vadd.f32 %v2192, %v2416
  %v2418 = vpop.f32.mrb[0].mxu0
  %v2419 = vpop.f32.mrb[0].mxu0
  %v2420 = vadd.f32 %v2195, %v2419
  %v2421 = vpop.f32.mrb[0].mxu0
  %2422 = vmatprep.mubr.bf16.mxu0 %v1082
  %2423 = vmatmul.mubr.bf16.gmra.mrb[0].mxu0 %v1081
  %v2424 = vpop.f32.mrb[0].mxu0
  %v2425 = vadd.f32 %v2200, %v2424
  %v2426 = vpop.f32.mrb[0].mxu0
  %v2427 = vpop.f32.mrb[0].mxu0
  %v2428 = vadd.f32 %v2203, %v2427
  %v2429 = vpop.f32.mrb[0].mxu0
  %2430 = vmatprep.mubr.bf16.mxu0 %v1091
  %2431 = vmatmul.mubr.bf16.gmra.mrb[0].mxu0 %v1090
  %v2432 = vpop.f32.mrb[0].mxu0
  %v2433 = vadd.f32 %v2208, %v2432
  %v2434 = vpop.f32.mrb[0].mxu0
  %v2435 = vpop.f32.mrb[0].mxu0
  %v2436 = vadd.f32 %v2211, %v2435
  %v2437 = vpop.f32.mrb[0].mxu0
  %2438 = vmatprep.mubr.bf16.mxu0 %v1100
  %2439 = vmatmul.mubr.bf16.gmra.mrb[0].mxu0 %v1099
  %v2440 = vpop.f32.mrb[0].mxu0
  %v2441 = vadd.f32 %v2216, %v2440
  %v2442 = vpop.f32.mrb[0].mxu0
  %v2443 = vpop.f32.mrb[0].mxu0
  %v2444 = vadd.f32 %v2219, %v2443
  %v2445 = vpop.f32.mrb[0].mxu0
  %2446 = vmatprep.mubr.bf16.mxu0 %v1109
  %2447 = vmatmul.mubr.bf16.gmra.mrb[0].mxu0 %v1108
  %v2448 = vpop.f32.mrb[0].mxu0
  %v2449 = vadd.f32 %v2224, %v2448
  %v2450 = vpop.f32.mrb[0].mxu0
  %v2451 = vpop.f32.mrb[0].mxu0
  %v2452 = vadd.f32 %v2227, %v2451
  %v2453 = vpop.f32.mrb[0].mxu0
  %2454 = vmatprep.mubr.bf16.mxu0 %v1118
  %2455 = vmatmul.mubr.bf16.gmra.mrb[0].mxu0 %v1117
  %v2456 = vpop.f32.mrb[0].mxu0
  %v2457 = vadd.f32 %v2232, %v2456
  %v2458 = vpop.f32.mrb[0].mxu0
  %v2459 = vpop.f32.mrb[0].mxu0
  %v2460 = vadd.f32 %v2235, %v2459
  %v2461 = vpop.f32.mrb[0].mxu0
  %2462 = vmatprep.mubr.bf16.mxu0 %v1127
  %2463 = vmatmul.mubr.bf16.gmra.mrb[0].mxu0 %v1126
  %v2464 = vpop.f32.mrb[0].mxu0
  %v2465 = vadd.f32 %v2240, %v2464
  %v2466 = vpop.f32.mrb[0].mxu0
  %v2467 = vpop.f32.mrb[0].mxu0
  %v2468 = vadd.f32 %v2243, %v2467
  %v2469 = vpop.f32.mrb[0].mxu0
  %2470 = vmatprep.mubr.bf16.mxu0 %v1136
  %2471 = vmatmul.mubr.bf16.gmra.mrb[0].mxu0 %v1135
  %v2472 = vpop.f32.mrb[0].mxu0
  %v2473 = vadd.f32 %v2248, %v2472
  %v2474 = vpop.f32.mrb[0].mxu0
  %v2475 = vpop.f32.mrb[0].mxu0
  %v2476 = vadd.f32 %v2251, %v2475
  %v2477 = vpop.f32.mrb[0].mxu0
  %2478 = vmatprep.mubr.bf16.mxu0 %v1145
  %2479 = vmatmul.mubr.bf16.gmra.mrb[0].mxu0 %v1144
  %v2480 = vpop.f32.mrb[0].mxu0
  %v2481 = vadd.f32 %v2256, %v2480
  %v2482 = vpop.f32.mrb[0].mxu0
  %v2483 = vpop.f32.mrb[0].mxu0
  %v2484 = vadd.f32 %v2259, %v2483
  %v2485 = vpop.f32.mrb[0].mxu0
  %2486 = vmatprep.mubr.bf16.mxu0 %v1154
  %2487 = vmatmul.mubr.bf16.gmra.mrb[0].mxu0 %v1153
  %v2488 = vpop.f32.mrb[0].mxu0
  %v2489 = vadd.f32 %v2264, %v2488
  %v2490 = vpop.f32.mrb[0].mxu0
  %v2491 = vpop.f32.mrb[0].mxu0
  %v2492 = vadd.f32 %v2267, %v2491
  %v2493 = vpop.f32.mrb[0].mxu0
  %2494 = vmatprep.mubr.bf16.mxu0 %v1163
  %2495 = vmatmul.mubr.bf16.gmra.mrb[0].mxu0 %v1162
  %v2496 = vpop.f32.mrb[0].mxu0
  %v2497 = vadd.f32 %v2272, %v2496
  %v2498 = vpop.f32.mrb[0].mxu0
  %v2499 = vpop.f32.mrb[0].mxu0
  %v2500 = vadd.f32 %v2275, %v2499
  %v2501 = vpop.f32.mrb[0].mxu0
  %2502 = vmatprep.mubr.bf16.mxu0 %v1172
  %2503 = vmatmul.mubr.bf16.gmra.mrb[0].mxu0 %v1171
  %v2504 = vpop.f32.mrb[0].mxu0
  %v2505 = vadd.f32 %v2280, %v2504
  %v2506 = vpop.f32.mrb[0].mxu0
  %v2507 = vpop.f32.mrb[0].mxu0
  %v2508 = vadd.f32 %v2283, %v2507
  %v2509 = vpop.f32.mrb[0].mxu0
  %2510 = vmatprep.mubr.bf16.mxu0 %v1181
  %2511 = vmatmul.mubr.bf16.gmra.mrb[0].mxu0 %v1180
  %v2512 = vpop.f32.mrb[0].mxu0
  %v2513 = vadd.f32 %v2288, %v2512
  %v2514 = vpop.f32.mrb[0].mxu0
  %v2515 = vpop.f32.mrb[0].mxu0
  %v2516 = vadd.f32 %v2291, %v2515
  %v2517 = vpop.f32.mrb[0].mxu0
  %2518 = vmatprep.mubr.bf16.mxu0 %v1190
  %2519 = vmatmul.mubr.bf16.gmra.mrb[0].mxu0 %v1189
  %v2520 = vpop.f32.mrb[0].mxu0
  %v2521 = vadd.f32 %v2296, %v2520
  %v2522 = vpop.f32.mrb[0].mxu0
  %v2523 = vpop.f32.mrb[0].mxu0
  %v2524 = vadd.f32 %v2299, %v2523
  %v2525 = vpop.f32.mrb[0].mxu0
  %2526 = vmatprep.mubr.bf16.mxu0 %v1199
  %2527 = vmatmul.mubr.bf16.gmra.mrb[0].mxu0 %v1198
  %v2528 = vpop.f32.mrb[0].mxu0
  %v2529 = vadd.f32 %v2304, %v2528
  %v2530 = vpop.f32.mrb[0].mxu0
  %v2531 = vpop.f32.mrb[0].mxu0
  %v2532 = vadd.f32 %v2307, %v2531
  %v2533 = vpop.f32.mrb[0].mxu0
  %2534 = vmatprep.mubr.bf16.mxu0 %v1208
  %2535 = vmatmul.mubr.bf16.gmra.mrb[0].mxu0 %v1207
  %v2536 = vpop.f32.mrb[0].mxu0
  %v2537 = vadd.f32 %v2312, %v2536
  %v2538 = vpop.f32.mrb[0].mxu0
  %v2539 = vpop.f32.mrb[0].mxu0
  %v2540 = vadd.f32 %v2315, %v2539
  %v2541 = vpop.f32.mrb[0].mxu0
  %2542 = vmatprep.mubr.bf16.mxu0 %v1217
  %2543 = vmatmul.mubr.bf16.gmra.mrb[0].mxu0 %v1216
  %v2544 = vpop.f32.mrb[0].mxu0
  %v2545 = vadd.f32 %v2320, %v2544
  %v2546 = vpop.f32.mrb[0].mxu0
  %v2547 = vpop.f32.mrb[0].mxu0
  %v2548 = vadd.f32 %v2323, %v2547
  %v2549 = vpop.f32.mrb[0].mxu0
  %2550 = vmatprep.mubr.bf16.mxu0 %v1226
  %2551 = vmatmul.mubr.bf16.gmra.mrb[0].mxu0 %v1225
  %v2552 = vpop.f32.mrb[0].mxu0
  %v2553 = vadd.f32 %v2328, %v2552
  %v2554 = vpop.f32.mrb[0].mxu0
  %v2555 = vpop.f32.mrb[0].mxu0
  %v2556 = vadd.f32 %v2331, %v2555
  %v2557 = vpop.f32.mrb[0].mxu0
  %2558 = vmatprep.mubr.bf16.mxu0 %v1235
  %2559 = vmatmul.mubr.bf16.gmra.mrb[0].mxu0 %v1234
  %v2560 = vpop.f32.mrb[0].mxu0
  %v2561 = vadd.f32 %v2336, %v2560
  %v2562 = vpop.f32.mrb[0].mxu0
  %v2563 = vpop.f32.mrb[0].mxu0
  %v2564 = vadd.f32 %v2339, %v2563
  %v2565 = vpop.f32.mrb[0].mxu0
  %2566 = vmatprep.mubr.bf16.mxu0 %v1244
  %2567 = vmatmul.mubr.bf16.gmra.mrb[0].mxu0 %v1243
  %v2568 = vpop.f32.mrb[0].mxu0
  %v2569 = vadd.f32 %v2344, %v2568
  %v2570 = vpop.f32.mrb[0].mxu0
  %v2571 = vpop.f32.mrb[0].mxu0
  %v2572 = vadd.f32 %v2347, %v2571
  %v2573 = vpop.f32.mrb[0].mxu0
  %2574 = vmatprep.mubr.bf16.mxu0 %v1253
  %2575 = vmatmul.mubr.bf16.gmra.mrb[0].mxu0 %v1252
  %v2576 = vpop.f32.mrb[0].mxu0
  %v2577 = vadd.f32 %v2352, %v2576
  %v2578 = vpop.f32.mrb[0].mxu0
  %v2579 = vpop.f32.mrb[0].mxu0
  %v2580 = vadd.f32 %v2355, %v2579
  %v2581 = vpop.f32.mrb[0].mxu0
  %2582 = vmatprep.mubr.bf16.mxu0 %v1262
  %2583 = vmatmul.mubr.bf16.gmra.mrb[0].mxu0 %v1261
  %v2584 = vpop.f32.mrb[0].mxu0
  %v2585 = vadd.f32 %v2360, %v2584
  %v2586 = vpop.f32.mrb[0].mxu0
  %v2587 = vpop.f32.mrb[0].mxu0
  %v2588 = vadd.f32 %v2363, %v2587
  %v2589 = vpop.f32.mrb[0].mxu0
  %2590 = vmatprep.mubr.bf16.mxu0 %v1271
  %2591 = vmatmul.mubr.bf16.gmra.mrb[0].mxu0 %v1270
  %v2592 = vpop.f32.mrb[0].mxu0
  %v2593 = vadd.f32 %v2368, %v2592
  %v2594 = vpop.f32.mrb[0].mxu0
  %v2595 = vpop.f32.mrb[0].mxu0
  %v2596 = vadd.f32 %v2371, %v2595
  %v2597 = vpop.f32.mrb[0].mxu0
  %2598 = vmatprep.mubr.bf16.mxu0 %v1280
  %2599 = vmatmul.mubr.bf16.gmra.mrb[0].mxu0 %v1279
  %v2600 = vpop.f32.mrb[0].mxu0
  %v2601 = vadd.f32 %v2376, %v2600
  %v2602 = vpop.f32.mrb[0].mxu0
  %v2603 = vpop.f32.mrb[0].mxu0
  %v2604 = vadd.f32 %v2379, %v2603
  %v2605 = vpop.f32.mrb[0].mxu0
  %2606 = vdwg.mxu0
  %2607 = vmatprep.subr.bf16.mxu0 0
  %2608 = vmatpush1.bf16.msra.mxu0 %v1836
  %2609 = vmatprep.subr.bf16.mxu0 0
  %2610 = vmatpush1.bf16.msra.mxu0 %v1837
  %2611 = vmatprep.subr.bf16.mxu0 0
  %2612 = vmatpush1.bf16.msra.mxu0 %v1838
  %2613 = vmatprep.subr.bf16.mxu0 0
  %2614 = vmatpush1.bf16.msra.mxu0 %v1839
  %2615 = vmatprep.subr.bf16.mxu0 0
  %2616 = vmatpush1.bf16.msra.mxu0 %v1840
  %2617 = vmatprep.subr.bf16.mxu0 0
  %2618 = vmatpush1.bf16.msra.mxu0 %v1841
  %2619 = vmatprep.subr.bf16.mxu0 0
  %2620 = vmatpush1.bf16.msra.mxu0 %v1842
  %2621 = vmatprep.subr.bf16.mxu0 0
  %2622 = vmatpush1.bf16.msra.mxu0 %v1843
  %2623 = vmatprep.subr.bf16.mxu0 0
  %2624 = vmatpush1.bf16.msra.mxu0 %v1844
  %2625 = vmatprep.subr.bf16.mxu0 0
  %2626 = vmatpush1.bf16.msra.mxu0 %v1845
  %2627 = vmatprep.subr.bf16.mxu0 0
  %2628 = vmatpush1.bf16.msra.mxu0 %v1846
  %2629 = vmatprep.subr.bf16.mxu0 0
  %2630 = vmatpush1.bf16.msra.mxu0 %v1847
  %2631 = vmatprep.subr.bf16.mxu0 0
  %2632 = vmatpush1.bf16.msra.mxu0 %v1848
  %2633 = vmatprep.subr.bf16.mxu0 0
  %2634 = vmatpush1.bf16.msra.mxu0 %v1849
  %2635 = vmatprep.subr.bf16.mxu0 0
  %2636 = vmatpush1.bf16.msra.mxu0 %v1850
  %2637 = vmatprep.subr.bf16.mxu0 0
  %2638 = vmatpush1.bf16.msra.mxu0 %v1851
  %2639 = vmatprep.mubr.bf16.mxu0 %v1075
  %2640 = vmatmul.mubr.bf16.gmra.mrb[0].mxu0 %v1074
  %v2641 = vpop.f32.mrb[0].mxu0
  %v2642 = vadd.f32 %v2417, %v2641
  %v2643 = vpop.f32.mrb[0].mxu0
  %v2644 = vpop.f32.mrb[0].mxu0
  %v2645 = vadd.f32 %v2420, %v2644
  %v2646 = vpop.f32.mrb[0].mxu0
  %2647 = vmatprep.mubr.bf16.mxu0 %v1084
  %2648 = vmatmul.mubr.bf16.gmra.mrb[0].mxu0 %v1083
  %v2649 = vpop.f32.mrb[0].mxu0
  %v2650 = vadd.f32 %v2425, %v2649
  %v2651 = vpop.f32.mrb[0].mxu0
  %v2652 = vpop.f32.mrb[0].mxu0
  %v2653 = vadd.f32 %v2428, %v2652
  %v2654 = vpop.f32.mrb[0].mxu0
  %2655 = vmatprep.mubr.bf16.mxu0 %v1093
  %2656 = vmatmul.mubr.bf16.gmra.mrb[0].mxu0 %v1092
  %v2657 = vpop.f32.mrb[0].mxu0
  %v2658 = vadd.f32 %v2433, %v2657
  %v2659 = vpop.f32.mrb[0].mxu0
  %v2660 = vpop.f32.mrb[0].mxu0
  %v2661 = vadd.f32 %v2436, %v2660
  %v2662 = vpop.f32.mrb[0].mxu0
  %2663 = vmatprep.mubr.bf16.mxu0 %v1102
  %2664 = vmatmul.mubr.bf16.gmra.mrb[0].mxu0 %v1101
  %v2665 = vpop.f32.mrb[0].mxu0
  %v2666 = vadd.f32 %v2441, %v2665
  %v2667 = vpop.f32.mrb[0].mxu0
  %v2668 = vpop.f32.mrb[0].mxu0
  %v2669 = vadd.f32 %v2444, %v2668
  %v2670 = vpop.f32.mrb[0].mxu0
  %2671 = vmatprep.mubr.bf16.mxu0 %v1111
  %2672 = vmatmul.mubr.bf16.gmra.mrb[0].mxu0 %v1110
  %v2673 = vpop.f32.mrb[0].mxu0
  %v2674 = vadd.f32 %v2449, %v2673
  %v2675 = vpop.f32.mrb[0].mxu0
  %v2676 = vpop.f32.mrb[0].mxu0
  %v2677 = vadd.f32 %v2452, %v2676
  %v2678 = vpop.f32.mrb[0].mxu0
  %2679 = vmatprep.mubr.bf16.mxu0 %v1120
  %2680 = vmatmul.mubr.bf16.gmra.mrb[0].mxu0 %v1119
  %v2681 = vpop.f32.mrb[0].mxu0
  %v2682 = vadd.f32 %v2457, %v2681
  %v2683 = vpop.f32.mrb[0].mxu0
  %v2684 = vpop.f32.mrb[0].mxu0
  %v2685 = vadd.f32 %v2460, %v2684
  %v2686 = vpop.f32.mrb[0].mxu0
  %2687 = vmatprep.mubr.bf16.mxu0 %v1129
  %2688 = vmatmul.mubr.bf16.gmra.mrb[0].mxu0 %v1128
  %v2689 = vpop.f32.mrb[0].mxu0
  %v2690 = vadd.f32 %v2465, %v2689
  %v2691 = vpop.f32.mrb[0].mxu0
  %v2692 = vpop.f32.mrb[0].mxu0
  %v2693 = vadd.f32 %v2468, %v2692
  %v2694 = vpop.f32.mrb[0].mxu0
  %2695 = vmatprep.mubr.bf16.mxu0 %v1138
  %2696 = vmatmul.mubr.bf16.gmra.mrb[0].mxu0 %v1137
  %v2697 = vpop.f32.mrb[0].mxu0
  %v2698 = vadd.f32 %v2473, %v2697
  %v2699 = vpop.f32.mrb[0].mxu0
  %v2700 = vpop.f32.mrb[0].mxu0
  %v2701 = vadd.f32 %v2476, %v2700
  %v2702 = vpop.f32.mrb[0].mxu0
  %2703 = vmatprep.mubr.bf16.mxu0 %v1147
  %2704 = vmatmul.mubr.bf16.gmra.mrb[0].mxu0 %v1146
  %v2705 = vpop.f32.mrb[0].mxu0
  %v2706 = vadd.f32 %v2481, %v2705
  %v2707 = vpop.f32.mrb[0].mxu0
  %v2708 = vpop.f32.mrb[0].mxu0
  %v2709 = vadd.f32 %v2484, %v2708
  %v2710 = vpop.f32.mrb[0].mxu0
  %2711 = vmatprep.mubr.bf16.mxu0 %v1156
  %2712 = vmatmul.mubr.bf16.gmra.mrb[0].mxu0 %v1155
  %v2713 = vpop.f32.mrb[0].mxu0
  %v2714 = vadd.f32 %v2489, %v2713
  %v2715 = vpop.f32.mrb[0].mxu0
  %v2716 = vpop.f32.mrb[0].mxu0
  %v2717 = vadd.f32 %v2492, %v2716
  %v2718 = vpop.f32.mrb[0].mxu0
  %2719 = vmatprep.mubr.bf16.mxu0 %v1165
  %2720 = vmatmul.mubr.bf16.gmra.mrb[0].mxu0 %v1164
  %v2721 = vpop.f32.mrb[0].mxu0
  %v2722 = vadd.f32 %v2497, %v2721
  %v2723 = vpop.f32.mrb[0].mxu0
  %v2724 = vpop.f32.mrb[0].mxu0
  %v2725 = vadd.f32 %v2500, %v2724
  %v2726 = vpop.f32.mrb[0].mxu0
  %2727 = vmatprep.mubr.bf16.mxu0 %v1174
  %2728 = vmatmul.mubr.bf16.gmra.mrb[0].mxu0 %v1173
  %v2729 = vpop.f32.mrb[0].mxu0
  %v2730 = vadd.f32 %v2505, %v2729
  %v2731 = vpop.f32.mrb[0].mxu0
  %v2732 = vpop.f32.mrb[0].mxu0
  %v2733 = vadd.f32 %v2508, %v2732
  %v2734 = vpop.f32.mrb[0].mxu0
  %2735 = vmatprep.mubr.bf16.mxu0 %v1183
  %2736 = vmatmul.mubr.bf16.gmra.mrb[0].mxu0 %v1182
  %v2737 = vpop.f32.mrb[0].mxu0
  %v2738 = vadd.f32 %v2513, %v2737
  %v2739 = vpop.f32.mrb[0].mxu0
  %v2740 = vpop.f32.mrb[0].mxu0
  %v2741 = vadd.f32 %v2516, %v2740
  %v2742 = vpop.f32.mrb[0].mxu0
  %2743 = vmatprep.mubr.bf16.mxu0 %v1192
  %2744 = vmatmul.mubr.bf16.gmra.mrb[0].mxu0 %v1191
  %v2745 = vpop.f32.mrb[0].mxu0
  %v2746 = vadd.f32 %v2521, %v2745
  %v2747 = vpop.f32.mrb[0].mxu0
  %v2748 = vpop.f32.mrb[0].mxu0
  %v2749 = vadd.f32 %v2524, %v2748
  %v2750 = vpop.f32.mrb[0].mxu0
  %2751 = vmatprep.mubr.bf16.mxu0 %v1201
  %2752 = vmatmul.mubr.bf16.gmra.mrb[0].mxu0 %v1200
  %v2753 = vpop.f32.mrb[0].mxu0
  %v2754 = vadd.f32 %v2529, %v2753
  %v2755 = vpop.f32.mrb[0].mxu0
  %v2756 = vpop.f32.mrb[0].mxu0
  %v2757 = vadd.f32 %v2532, %v2756
  %v2758 = vpop.f32.mrb[0].mxu0
  %2759 = vmatprep.mubr.bf16.mxu0 %v1210
  %2760 = vmatmul.mubr.bf16.gmra.mrb[0].mxu0 %v1209
  %v2761 = vpop.f32.mrb[0].mxu0
  %v2762 = vadd.f32 %v2537, %v2761
  %v2763 = vpop.f32.mrb[0].mxu0
  %v2764 = vpop.f32.mrb[0].mxu0
  %v2765 = vadd.f32 %v2540, %v2764
  %v2766 = vpop.f32.mrb[0].mxu0
  %2767 = vmatprep.mubr.bf16.mxu0 %v1219
  %2768 = vmatmul.mubr.bf16.gmra.mrb[0].mxu0 %v1218
  %v2769 = vpop.f32.mrb[0].mxu0
  %v2770 = vadd.f32 %v2545, %v2769
  %v2771 = vpop.f32.mrb[0].mxu0
  %v2772 = vpop.f32.mrb[0].mxu0
  %v2773 = vadd.f32 %v2548, %v2772
  %v2774 = vpop.f32.mrb[0].mxu0
  %2775 = vmatprep.mubr.bf16.mxu0 %v1228
  %2776 = vmatmul.mubr.bf16.gmra.mrb[0].mxu0 %v1227
  %v2777 = vpop.f32.mrb[0].mxu0
  %v2778 = vadd.f32 %v2553, %v2777
  %v2779 = vpop.f32.mrb[0].mxu0
  %v2780 = vpop.f32.mrb[0].mxu0
  %v2781 = vadd.f32 %v2556, %v2780
  %v2782 = vpop.f32.mrb[0].mxu0
  %2783 = vmatprep.mubr.bf16.mxu0 %v1237
  %2784 = vmatmul.mubr.bf16.gmra.mrb[0].mxu0 %v1236
  %v2785 = vpop.f32.mrb[0].mxu0
  %v2786 = vadd.f32 %v2561, %v2785
  %v2787 = vpop.f32.mrb[0].mxu0
  %v2788 = vpop.f32.mrb[0].mxu0
  %v2789 = vadd.f32 %v2564, %v2788
  %v2790 = vpop.f32.mrb[0].mxu0
  %2791 = vmatprep.mubr.bf16.mxu0 %v1246
  %2792 = vmatmul.mubr.bf16.gmra.mrb[0].mxu0 %v1245
  %v2793 = vpop.f32.mrb[0].mxu0
  %v2794 = vadd.f32 %v2569, %v2793
  %v2795 = vpop.f32.mrb[0].mxu0
  %v2796 = vpop.f32.mrb[0].mxu0
  %v2797 = vadd.f32 %v2572, %v2796
  %v2798 = vpop.f32.mrb[0].mxu0
  %2799 = vmatprep.mubr.bf16.mxu0 %v1255
  %2800 = vmatmul.mubr.bf16.gmra.mrb[0].mxu0 %v1254
  %v2801 = vpop.f32.mrb[0].mxu0
  %v2802 = vadd.f32 %v2577, %v2801
  %v2803 = vpop.f32.mrb[0].mxu0
  %v2804 = vpop.f32.mrb[0].mxu0
  %v2805 = vadd.f32 %v2580, %v2804
  %v2806 = vpop.f32.mrb[0].mxu0
  %2807 = vmatprep.mubr.bf16.mxu0 %v1264
  %2808 = vmatmul.mubr.bf16.gmra.mrb[0].mxu0 %v1263
  %v2809 = vpop.f32.mrb[0].mxu0
  %v2810 = vadd.f32 %v2585, %v2809
  %v2811 = vpop.f32.mrb[0].mxu0
  %v2812 = vpop.f32.mrb[0].mxu0
  %v2813 = vadd.f32 %v2588, %v2812
  %v2814 = vpop.f32.mrb[0].mxu0
  %2815 = vmatprep.mubr.bf16.mxu0 %v1273
  %2816 = vmatmul.mubr.bf16.gmra.mrb[0].mxu0 %v1272
  %v2817 = vpop.f32.mrb[0].mxu0
  %v2818 = vadd.f32 %v2593, %v2817
  %v2819 = vpop.f32.mrb[0].mxu0
  %v2820 = vpop.f32.mrb[0].mxu0
  %v2821 = vadd.f32 %v2596, %v2820
  %v2822 = vpop.f32.mrb[0].mxu0
  %2823 = vmatprep.mubr.bf16.mxu0 %v1282
  %2824 = vmatmul.mubr.bf16.gmra.mrb[0].mxu0 %v1281
  %v2825 = vpop.f32.mrb[0].mxu0
  %v2826 = vadd.f32 %v2601, %v2825
  %v2827 = vpop.f32.mrb[0].mxu0
  %v2828 = vpop.f32.mrb[0].mxu0
  %v2829 = vadd.f32 %v2604, %v2828
  %v2830 = vpop.f32.mrb[0].mxu0
  %2831 = vdwg.mxu0
  %2832 = vmatprep.subr.bf16.mxu0 0
  %2833 = vmatpush1.bf16.msra.mxu0 %v1852
  %2834 = vmatprep.subr.bf16.mxu0 0
  %2835 = vmatpush1.bf16.msra.mxu0 %v1853
  %2836 = vmatprep.subr.bf16.mxu0 0
  %2837 = vmatpush1.bf16.msra.mxu0 %v1854
  %2838 = vmatprep.subr.bf16.mxu0 0
  %2839 = vmatpush1.bf16.msra.mxu0 %v1855
  %2840 = vmatprep.subr.bf16.mxu0 0
  %2841 = vmatpush1.bf16.msra.mxu0 %v1856
  %2842 = vmatprep.subr.bf16.mxu0 0
  %2843 = vmatpush1.bf16.msra.mxu0 %v1857
  %2844 = vmatprep.subr.bf16.mxu0 0
  %2845 = vmatpush1.bf16.msra.mxu0 %v1858
  %2846 = vmatprep.subr.bf16.mxu0 0
  %2847 = vmatpush1.bf16.msra.mxu0 %v1859
  %2848 = vmatprep.subr.bf16.mxu0 0
  %2849 = vmatpush1.bf16.msra.mxu0 0
  %2850 = vmatprep.subr.bf16.mxu0 0
  %2851 = vmatpush1.bf16.msra.mxu0 0
  %2852 = vmatprep.subr.bf16.mxu0 0
  %2853 = vmatpush1.bf16.msra.mxu0 0
  %2854 = vmatprep.subr.bf16.mxu0 0
  %2855 = vmatpush1.bf16.msra.mxu0 0
  %2856 = vmatprep.subr.bf16.mxu0 0
  %2857 = vmatpush1.bf16.msra.mxu0 0
  %2858 = vmatprep.subr.bf16.mxu0 0
  %2859 = vmatpush1.bf16.msra.mxu0 0
  %2860 = vmatprep.subr.bf16.mxu0 0
  %2861 = vmatpush1.bf16.msra.mxu0 0
  %2862 = vmatprep.subr.bf16.mxu0 0
  %2863 = vmatpush1.bf16.msra.mxu0 0
  %2864 = vmatprep.mubr.bf16.mxu0 0
  %2865 = vmatmul.mubr.bf16.gmra.mrb[0].mxu0 %v1076
  %v2866 = vpop.f32.mrb[0].mxu0
  %v2867 = vadd.f32 %v2642, %v2866
  %v2868 = vpop.f32.mrb[0].mxu0
  %v2869 = vpop.f32.mrb[0].mxu0
  %v2870 = vadd.f32 %v2645, %v2869
  %v2871 = vpop.f32.mrb[0].mxu0
  %2872 = vmatprep.mubr.bf16.mxu0 0
  %2873 = vmatmul.mubr.bf16.gmra.mrb[0].mxu0 %v1085
  %v2874 = vpop.f32.mrb[0].mxu0
  %v2875 = vadd.f32 %v2650, %v2874
  %v2876 = vpop.f32.mrb[0].mxu0
  %v2877 = vpop.f32.mrb[0].mxu0
  %v2878 = vadd.f32 %v2653, %v2877
  %v2879 = vpop.f32.mrb[0].mxu0
  %2880 = vmatprep.mubr.bf16.mxu0 0
  %2881 = vmatmul.mubr.bf16.gmra.mrb[0].mxu0 %v1094
  %v2882 = vpop.f32.mrb[0].mxu0
  %v2883 = vadd.f32 %v2658, %v2882
  %v2884 = vpop.f32.mrb[0].mxu0
  %v2885 = vpop.f32.mrb[0].mxu0
  %v2886 = vadd.f32 %v2661, %v2885
  %v2887 = vpop.f32.mrb[0].mxu0
  %2888 = vmatprep.mubr.bf16.mxu0 0
  %2889 = vmatmul.mubr.bf16.gmra.mrb[0].mxu0 %v1103
  %v2890 = vpop.f32.mrb[0].mxu0
  %v2891 = vadd.f32 %v2666, %v2890
  %v2892 = vpop.f32.mrb[0].mxu0
  %v2893 = vpop.f32.mrb[0].mxu0
  %v2894 = vadd.f32 %v2669, %v2893
  %v2895 = vpop.f32.mrb[0].mxu0
  %2896 = vmatprep.mubr.bf16.mxu0 0
  %2897 = vmatmul.mubr.bf16.gmra.mrb[0].mxu0 %v1112
  %v2898 = vpop.f32.mrb[0].mxu0
  %v2899 = vadd.f32 %v2674, %v2898
  %v2900 = vpop.f32.mrb[0].mxu0
  %v2901 = vpop.f32.mrb[0].mxu0
  %v2902 = vadd.f32 %v2677, %v2901
  %v2903 = vpop.f32.mrb[0].mxu0
  %2904 = vmatprep.mubr.bf16.mxu0 0
  %2905 = vmatmul.mubr.bf16.gmra.mrb[0].mxu0 %v1121
  %v2906 = vpop.f32.mrb[0].mxu0
  %v2907 = vadd.f32 %v2682, %v2906
  %v2908 = vpop.f32.mrb[0].mxu0
  %v2909 = vpop.f32.mrb[0].mxu0
  %v2910 = vadd.f32 %v2685, %v2909
  %v2911 = vpop.f32.mrb[0].mxu0
  %2912 = vmatprep.mubr.bf16.mxu0 0
  %2913 = vmatmul.mubr.bf16.gmra.mrb[0].mxu0 %v1130
  %v2914 = vpop.f32.mrb[0].mxu0
  %v2915 = vadd.f32 %v2690, %v2914
  %v2916 = vpop.f32.mrb[0].mxu0
  %v2917 = vpop.f32.mrb[0].mxu0
  %v2918 = vadd.f32 %v2693, %v2917
  %v2919 = vpop.f32.mrb[0].mxu0
  %2920 = vmatprep.mubr.bf16.mxu0 0
  %2921 = vmatmul.mubr.bf16.gmra.mrb[0].mxu0 %v1139
  %v2922 = vpop.f32.mrb[0].mxu0
  %v2923 = vadd.f32 %v2698, %v2922
  %v2924 = vpop.f32.mrb[0].mxu0
  %v2925 = vpop.f32.mrb[0].mxu0
  %v2926 = vadd.f32 %v2701, %v2925
  %v2927 = vpop.f32.mrb[0].mxu0
  %2928 = vmatprep.mubr.bf16.mxu0 0
  %2929 = vmatmul.mubr.bf16.gmra.mrb[0].mxu0 %v1148
  %v2930 = vpop.f32.mrb[0].mxu0
  %v2931 = vadd.f32 %v2706, %v2930
  %v2932 = vpop.f32.mrb[0].mxu0
  %v2933 = vpop.f32.mrb[0].mxu0
  %v2934 = vadd.f32 %v2709, %v2933
  %v2935 = vpop.f32.mrb[0].mxu0
  %2936 = vmatprep.mubr.bf16.mxu0 0
  %2937 = vmatmul.mubr.bf16.gmra.mrb[0].mxu0 %v1157
  %v2938 = vpop.f32.mrb[0].mxu0
  %v2939 = vadd.f32 %v2714, %v2938
  %v2940 = vpop.f32.mrb[0].mxu0
  %v2941 = vpop.f32.mrb[0].mxu0
  %v2942 = vadd.f32 %v2717, %v2941
  %v2943 = vpop.f32.mrb[0].mxu0
  %2944 = vmatprep.mubr.bf16.mxu0 0
  %2945 = vmatmul.mubr.bf16.gmra.mrb[0].mxu0 %v1166
  %v2946 = vpop.f32.mrb[0].mxu0
  %v2947 = vadd.f32 %v2722, %v2946
  %v2948 = vpop.f32.mrb[0].mxu0
  %v2949 = vpop.f32.mrb[0].mxu0
  %v2950 = vadd.f32 %v2725, %v2949
  %v2951 = vpop.f32.mrb[0].mxu0
  %2952 = vmatprep.mubr.bf16.mxu0 0
  %2953 = vmatmul.mubr.bf16.gmra.mrb[0].mxu0 %v1175
  %v2954 = vpop.f32.mrb[0].mxu0
  %v2955 = vadd.f32 %v2730, %v2954
  %v2956 = vpop.f32.mrb[0].mxu0
  %v2957 = vpop.f32.mrb[0].mxu0
  %v2958 = vadd.f32 %v2733, %v2957
  %v2959 = vpop.f32.mrb[0].mxu0
  %2960 = vmatprep.mubr.bf16.mxu0 0
  %2961 = vmatmul.mubr.bf16.gmra.mrb[0].mxu0 %v1184
  %v2962 = vpop.f32.mrb[0].mxu0
  %v2963 = vadd.f32 %v2738, %v2962
  %v2964 = vpop.f32.mrb[0].mxu0
  %v2965 = vpop.f32.mrb[0].mxu0
  %v2966 = vadd.f32 %v2741, %v2965
  %v2967 = vpop.f32.mrb[0].mxu0
  %2968 = vmatprep.mubr.bf16.mxu0 0
  %2969 = vmatmul.mubr.bf16.gmra.mrb[0].mxu0 %v1193
  %v2970 = vpop.f32.mrb[0].mxu0
  %v2971 = vadd.f32 %v2746, %v2970
  %v2972 = vpop.f32.mrb[0].mxu0
  %v2973 = vpop.f32.mrb[0].mxu0
  %v2974 = vadd.f32 %v2749, %v2973
  %v2975 = vpop.f32.mrb[0].mxu0
  %2976 = vmatprep.mubr.bf16.mxu0 0
  %2977 = vmatmul.mubr.bf16.gmra.mrb[0].mxu0 %v1202
  %v2978 = vpop.f32.mrb[0].mxu0
  %v2979 = vadd.f32 %v2754, %v2978
  %v2980 = vpop.f32.mrb[0].mxu0
  %v2981 = vpop.f32.mrb[0].mxu0
  %v2982 = vadd.f32 %v2757, %v2981
  %v2983 = vpop.f32.mrb[0].mxu0
  %2984 = vmatprep.mubr.bf16.mxu0 0
  %2985 = vmatmul.mubr.bf16.gmra.mrb[0].mxu0 %v1211
  %v2986 = vpop.f32.mrb[0].mxu0
  %v2987 = vadd.f32 %v2762, %v2986
  %v2988 = vpop.f32.mrb[0].mxu0
  %v2989 = vpop.f32.mrb[0].mxu0
  %v2990 = vadd.f32 %v2765, %v2989
  %v2991 = vpop.f32.mrb[0].mxu0
  %2992 = vmatprep.mubr.bf16.mxu0 0
  %2993 = vmatmul.mubr.bf16.gmra.mrb[0].mxu0 %v1220
  %v2994 = vpop.f32.mrb[0].mxu0
  %v2995 = vadd.f32 %v2770, %v2994
  %v2996 = vpop.f32.mrb[0].mxu0
  %v2997 = vpop.f32.mrb[0].mxu0
  %v2998 = vadd.f32 %v2773, %v2997
  %v2999 = vpop.f32.mrb[0].mxu0
  %3000 = vmatprep.mubr.bf16.mxu0 0
  %3001 = vmatmul.mubr.bf16.gmra.mrb[0].mxu0 %v1229
  %v3002 = vpop.f32.mrb[0].mxu0
  %v3003 = vadd.f32 %v2778, %v3002
  %v3004 = vpop.f32.mrb[0].mxu0
  %v3005 = vpop.f32.mrb[0].mxu0
  %v3006 = vadd.f32 %v2781, %v3005
  %v3007 = vpop.f32.mrb[0].mxu0
  %3008 = vmatprep.mubr.bf16.mxu0 0
  %3009 = vmatmul.mubr.bf16.gmra.mrb[0].mxu0 %v1238
  %v3010 = vpop.f32.mrb[0].mxu0
  %v3011 = vadd.f32 %v2786, %v3010
  %v3012 = vpop.f32.mrb[0].mxu0
  %v3013 = vpop.f32.mrb[0].mxu0
  %v3014 = vadd.f32 %v2789, %v3013
  %v3015 = vpop.f32.mrb[0].mxu0
  %3016 = vmatprep.mubr.bf16.mxu0 0
  %3017 = vmatmul.mubr.bf16.gmra.mrb[0].mxu0 %v1247
  %v3018 = vpop.f32.mrb[0].mxu0
  %v3019 = vadd.f32 %v2794, %v3018
  %v3020 = vpop.f32.mrb[0].mxu0
  %v3021 = vpop.f32.mrb[0].mxu0
  %v3022 = vadd.f32 %v2797, %v3021
  %v3023 = vpop.f32.mrb[0].mxu0
  %3024 = vmatprep.mubr.bf16.mxu0 0
  %3025 = vmatmul.mubr.bf16.gmra.mrb[0].mxu0 %v1256
  %v3026 = vpop.f32.mrb[0].mxu0
  %v3027 = vadd.f32 %v2802, %v3026
  %v3028 = vpop.f32.mrb[0].mxu0
  %v3029 = vpop.f32.mrb[0].mxu0
  %v3030 = vadd.f32 %v2805, %v3029
  %v3031 = vpop.f32.mrb[0].mxu0
  %3032 = vmatprep.mubr.bf16.mxu0 0
  %3033 = vmatmul.mubr.bf16.gmra.mrb[0].mxu0 %v1265
  %v3034 = vpop.f32.mrb[0].mxu0
  %v3035 = vadd.f32 %v2810, %v3034
  %v3036 = vpop.f32.mrb[0].mxu0
  %v3037 = vpop.f32.mrb[0].mxu0
  %v3038 = vadd.f32 %v2813, %v3037
  %v3039 = vpop.f32.mrb[0].mxu0
  %3040 = vmatprep.mubr.bf16.mxu0 0
  %3041 = vmatmul.mubr.bf16.gmra.mrb[0].mxu0 %v1274
  %v3042 = vpop.f32.mrb[0].mxu0
  %v3043 = vadd.f32 %v2818, %v3042
  %v3044 = vpop.f32.mrb[0].mxu0
  %v3045 = vpop.f32.mrb[0].mxu0
  %v3046 = vadd.f32 %v2821, %v3045
  %v3047 = vpop.f32.mrb[0].mxu0
  %3048 = vmatprep.mubr.bf16.mxu0 0
  %3049 = vmatmul.mubr.bf16.gmra.mrb[0].mxu0 %v1283
  %v3050 = vpop.f32.mrb[0].mxu0
  %v3051 = vadd.f32 %v2826, %v3050
  %v3052 = vpop.f32.mrb[0].mxu0
  %v3053 = vpop.f32.mrb[0].mxu0
  %v3054 = vadd.f32 %v2829, %v3053
  %v3055 = vpop.f32.mrb[0].mxu0
  %3056 = vdwg.mxu0
  %vm3057 = vcmask 203776
  %3058 = vst.msk [vmem:[%s2] sm:$0xff] %vm3057, %v2867
  %3059 = vst.msk [vmem:[%s2 + $0x8] sm:$0xff] %vm3057, %v2870
  %3060 = vst.msk [vmem:[%s2 + $0x10] sm:$0xff] %vm3057, %v2875
  %3061 = vst.msk [vmem:[%s2 + $0x18] sm:$0xff] %vm3057, %v2878
  %3062 = vst.msk [vmem:[%s2 + $0x20] sm:$0xff] %vm3057, %v2883
  %3063 = vst.msk [vmem:[%s2 + $0x28] sm:$0xff] %vm3057, %v2886
  %3064 = vst.msk [vmem:[%s2 + $0x30] sm:$0xff] %vm3057, %v2891
  %3065 = vst.msk [vmem:[%s2 + $0x38] sm:$0xff] %vm3057, %v2894
  %3066 = vst.msk [vmem:[%s2 + $0x40] sm:$0xff] %vm3057, %v2899
  %3067 = vst.msk [vmem:[%s2 + $0x48] sm:$0xff] %vm3057, %v2902
  %3068 = vst.msk [vmem:[%s2 + $0x50] sm:$0xff] %vm3057, %v2907
  %3069 = vst.msk [vmem:[%s2 + $0x58] sm:$0xff] %vm3057, %v2910
  %3070 = vst.msk [vmem:[%s2 + $0x60] sm:$0xff] %vm3057, %v2915
  %3071 = vst.msk [vmem:[%s2 + $0x68] sm:$0xff] %vm3057, %v2918
  %3072 = vst.msk [vmem:[%s2 + $0x70] sm:$0xff] %vm3057, %v2923
  %3073 = vst.msk [vmem:[%s2 + $0x78] sm:$0xff] %vm3057, %v2926
  %3074 = vst.msk [vmem:[%s2 + $0x80] sm:$0xff] %vm3057, %v2931
  %3075 = vst.msk [vmem:[%s2 + $0x88] sm:$0xff] %vm3057, %v2934
  %3076 = vst.msk [vmem:[%s2 + $0x90] sm:$0xff] %vm3057, %v2939
  %3077 = vst.msk [vmem:[%s2 + $0x98] sm:$0xff] %vm3057, %v2942
  %3078 = vst.msk [vmem:[%s2 + $0xa0] sm:$0xff] %vm3057, %v2947
  %3079 = vst.msk [vmem:[%s2 + $0xa8] sm:$0xff] %vm3057, %v2950
  %3080 = vst.msk [vmem:[%s2 + $0xb0] sm:$0xff] %vm3057, %v2955
  %3081 = vst.msk [vmem:[%s2 + $0xb8] sm:$0xff] %vm3057, %v2958
  %3082 = vst.msk [vmem:[%s2 + $0xc0] sm:$0xff] %vm3057, %v2963
  %3083 = vst.msk [vmem:[%s2 + $0xc8] sm:$0xff] %vm3057, %v2966
  %3084 = vst.msk [vmem:[%s2 + $0xd0] sm:$0xff] %vm3057, %v2971
  %3085 = vst.msk [vmem:[%s2 + $0xd8] sm:$0xff] %vm3057, %v2974
  %3086 = vst.msk [vmem:[%s2 + $0xe0] sm:$0xff] %vm3057, %v2979
  %3087 = vst.msk [vmem:[%s2 + $0xe8] sm:$0xff] %vm3057, %v2982
  %3088 = vst.msk [vmem:[%s2 + $0xf0] sm:$0xff] %vm3057, %v2987
  %3089 = vst.msk [vmem:[%s2 + $0xf8] sm:$0xff] %vm3057, %v2990
  %3090 = vst.msk [vmem:[%s2 + $0x100] sm:$0xff] %vm3057, %v2995
  %3091 = vst.msk [vmem:[%s2 + $0x108] sm:$0xff] %vm3057, %v2998
  %3092 = vst.msk [vmem:[%s2 + $0x110] sm:$0xff] %vm3057, %v3003
  %3093 = vst.msk [vmem:[%s2 + $0x118] sm:$0xff] %vm3057, %v3006
  %3094 = vst.msk [vmem:[%s2 + $0x120] sm:$0xff] %vm3057, %v3011
  %3095 = vst.msk [vmem:[%s2 + $0x128] sm:$0xff] %vm3057, %v3014
  %3096 = vst.msk [vmem:[%s2 + $0x130] sm:$0xff] %vm3057, %v3019
  %3097 = vst.msk [vmem:[%s2 + $0x138] sm:$0xff] %vm3057, %v3022
  %3098 = vst.msk [vmem:[%s2 + $0x140] sm:$0xff] %vm3057, %v3027
  %3099 = vst.msk [vmem:[%s2 + $0x148] sm:$0xff] %vm3057, %v3030
  %3100 = vst.msk [vmem:[%s2 + $0x150] sm:$0xff] %vm3057, %v3035
  %3101 = vst.msk [vmem:[%s2 + $0x158] sm:$0xff] %vm3057, %v3038
  %3102 = vst.msk [vmem:[%s2 + $0x160] sm:$0xff] %vm3057, %v3043
  %3103 = vst.msk [vmem:[%s2 + $0x168] sm:$0xff] %vm3057, %v3046
  %3104 = vst.msk [vmem:[%s2 + $0x170] sm:$0xff] %vm3057, %v3051
  %3105 = vst.msk [vmem:[%s2 + $0x178] sm:$0xff] %vm3057, %v3054
  // Predicated region
  $region10: #{conv2d_3x1.1} parent=0 // pred_check
    _
  $region11: #{conv2d_3x1.1} parent=0 // pred_check_branch
    %3107 = sbr.rel (0) target = $region13
  $region12: #{conv2d_3x1.1} parent=0 // pred_region
    _
  $region13: #{conv2d_3x1.1} parent=0 // pred_fallthru
    _
  // Predicated region
  $region14: #{conv2d_3x1.1} parent=0 // pred_check
    _
  $region15: #{conv2d_3x1.1} parent=0 // pred_check_branch
    %3109 = sbr.rel (0) target = $region17
  $region16: #{conv2d_3x1.1} parent=0 // pred_region
    _
  $region17: #{conv2d_3x1.1} parent=0 // pred_fallthru
    _

</llo_original>
